<compile_context>
chip_gen: v5e
topology: v5e:2x2
jax: 0.10.0
libtpu: 0.0.40
codegen_flags: <defaults>
</compile_context>

<pallas_src>
import functools

import jax
import jax.numpy as jnp
from jax.experimental import pallas as pl
from jax.experimental.pallas import tpu as pltpu


# ------------------------------- Pallas kernel --------------------------------

def _stage_kernel(*refs, n_layers, hidden, has_prev_geo, has_prev_sem):
    """Whole refinement stage for one mesh (grid is over the batch).

    Per-mesh inputs:
      adj (V, V)        dense per-mesh adjacency (block-diagonal structure exploited)
      ea  (V, 3+C+1)    extras = [vert_pos, textures, 1]  (the 1 folds biases)
      va  (V, Di+1)     vert_align image features, ones-augmented
    Broadcast weights:
      bw  (Di+1, 2H)                 fused [geometry | semantic] bottleneck
      whg/weg, whs/wes (L, ., 2H)    per-layer GraphConv [W0 | W1], split into
                                     h-part and extras-part
      whd_g/whd_s/whd_e (., 128pad)  heads zero-padded lane-dense:
                                     cols [0:3]=vert_offset, [3:3+C]=vert_semantic
    Outputs: packed head (V, HEAD_PAD), final geo feats (V, H), final sem feats (V, H).
    """
    (adj_ref, ea_ref, va_ref, bw_ref,
     whg_ref, weg_ref, whs_ref, wes_ref,
     whd_g_ref, whd_s_ref, whd_e_ref) = refs[:11]
    pos = 11
    pg_ref = wpg_ref = ps_ref = wps_ref = None
    if has_prev_geo:
        pg_ref, wpg_ref = refs[pos], refs[pos + 1]
        pos += 2
    if has_prev_sem:
        ps_ref, wps_ref = refs[pos], refs[pos + 1]
        pos += 2
    head_ref, hg_ref, hs_ref = refs[pos], refs[pos + 1], refs[pos + 2]

    H = hidden
    f32 = jnp.float32

    A = adj_ref[0]          # (V, V)
    E = ea_ref[0]           # (V, 3+C+1)
    VA = va_ref[0]          # (V, Di+1)

    # Fused geometry + semantic bottleneck (keeps the MXU output tile 2H wide).
    hb = jnp.maximum(jnp.dot(VA, bw_ref[...], preferred_element_type=f32), 0.0)
    hg = hb[:, :H]
    hs = hb[:, H:]

    # Unrolled GraphConv stacks; activations stay in VMEM/vregs across layers.
    for l in range(n_layers):
        zg = (jnp.dot(hg, whg_ref[l], preferred_element_type=f32) +
              jnp.dot(E, weg_ref[l], preferred_element_type=f32))
        zs = (jnp.dot(hs, whs_ref[l], preferred_element_type=f32) +
              jnp.dot(E, wes_ref[l], preferred_element_type=f32))
        if l == 0 and has_prev_geo:
            zg = zg + jnp.dot(pg_ref[0], wpg_ref[...], preferred_element_type=f32)
        if l == 0 and has_prev_sem:
            zs = zs + jnp.dot(ps_ref[0], wps_ref[...], preferred_element_type=f32)
        # GraphConv (undirected): W0 x_i + b0 + sum_{j in N(i)} (W1 x_j + b1), then ReLU.
        hg = jnp.maximum(zg[:, :H] + jnp.dot(A, zg[:, H:], preferred_element_type=f32), 0.0)
        hs = jnp.maximum(zs[:, :H] + jnp.dot(A, zs[:, H:], preferred_element_type=f32), 0.0)

    # Fused lane-dense heads (vert_offset + vert_semantic in one padded slab).
    head = (jnp.dot(hg, whd_g_ref[...], preferred_element_type=f32) +
            jnp.dot(hs, whd_s_ref[...], preferred_element_type=f32) +
            jnp.dot(E, whd_e_ref[...], preferred_element_type=f32))

    head_ref[0] = head.astype(head_ref.dtype)
    hg_ref[0] = hg.astype(hg_ref.dtype)
    hs_ref[0] = hs.astype(hs_ref.dtype)


def mesh_stage_fused(adj, extras_aug, va_aug, bw_aug,
                     w_h_geo, w_e_geo, w_h_sem, w_e_sem,
                     w_head_g, w_head_s, w_head_e,
                     prev_geo=None, w_p_geo=None, prev_sem=None, w_p_sem=None,
                     *, hidden, head_pad):
    N, V, _ = adj.shape
    L = w_h_geo.shape[0]
    has_pg = (prev_geo is not None) and (w_p_geo is not None)
    has_ps = (prev_sem is not None) and (w_p_sem is not None)

    def per_mesh(arr):
        return pl.BlockSpec((1,) + arr.shape[1:], lambda n: (n, 0, 0))

    def bcast(arr):
        zeros = (0,) * arr.ndim
        return pl.BlockSpec(arr.shape, lambda n, _z=zeros: _z)

    args = [adj, extras_aug, va_aug, bw_aug,
            w_h_geo, w_e_geo, w_h_sem, w_e_sem,
            w_head_g, w_head_s, w_head_e]
    in_specs = [per_mesh(adj), per_mesh(extras_aug), per_mesh(va_aug), bcast(bw_aug),
                bcast(w_h_geo), bcast(w_e_geo), bcast(w_h_sem), bcast(w_e_sem),
                bcast(w_head_g), bcast(w_head_s), bcast(w_head_e)]
    if has_pg:
        args += [prev_geo, w_p_geo]
        in_specs += [per_mesh(prev_geo), bcast(w_p_geo)]
    if has_ps:
        args += [prev_sem, w_p_sem]
        in_specs += [per_mesh(prev_sem), bcast(w_p_sem)]

    out_shape = (jax.ShapeDtypeStruct((N, V, head_pad), jnp.float32),
                 jax.ShapeDtypeStruct((N, V, hidden), jnp.float32),
                 jax.ShapeDtypeStruct((N, V, hidden), jnp.float32))
    out_specs = (pl.BlockSpec((1, V, head_pad), lambda n: (n, 0, 0)),
                 pl.BlockSpec((1, V, hidden), lambda n: (n, 0, 0)),
                 pl.BlockSpec((1, V, hidden), lambda n: (n, 0, 0)))

    # Rough per-step VMEM footprint (f32, x4 for double-buffering + headroom),
    # capped at v7x's 64 MiB physical VMEM.
    block_elems = (V * V + V * extras_aug.shape[-1] + V * va_aug.shape[-1] +
                   bw_aug.size + w_h_geo.size + w_e_geo.size + w_h_sem.size +
                   w_e_sem.size + w_head_g.size + w_head_s.size + w_head_e.size +
                   V * head_pad + 2 * V * hidden)
    vmem_limit = int(min(64 * 2 ** 20, max(32 * 2 ** 20, 4 * 4 * block_elems)))

    kernel = functools.partial(_stage_kernel, n_layers=L, hidden=hidden,
                               has_prev_geo=has_pg, has_prev_sem=has_ps)
    return pl.pallas_call(
        kernel,
        out_shape=out_shape,
        grid=(N,),
        in_specs=in_specs,
        out_specs=out_specs,
        compiler_params=pltpu.CompilerParams(
            dimension_semantics=("parallel",),
            vmem_limit_bytes=vmem_limit),
    )(*args)


# ------------------------------- plain-JAX glue --------------------------------

def project_verts(verts, P, eps=0.1):
    """Matches the reference: divides by the (sign-preserving, eps-clamped) 3rd coord."""
    N, V, _ = verts.shape
    ones = jnp.ones((N, V, 1), verts.dtype)
    verts_hom = jnp.concatenate([verts, ones], axis=2)              # (N, V, 4)
    verts_cam_hom = jnp.einsum("nvk,njk->nvj", verts_hom, P)        # bmm(verts_hom, P^T)
    w = verts_cam_hom[:, :, 2:3]
    w_sign = jnp.where(w == 0, jnp.ones_like(w), jnp.sign(w))
    w = w_sign * jnp.maximum(jnp.abs(w), eps)
    return verts_cam_hom[:, :, :3] / w


def _bilinear_corners(xy, H, W):
    """4-corner flat indices / weights for bilinear grid_sample
    (align_corners=True, padding_mode='zeros').  xy: (N, V, 2) in [-1, 1]."""
    x = xy[..., 0]
    y = xy[..., 1]
    ix = (x + 1.0) * 0.5 * (W - 1)
    iy = (y + 1.0) * 0.5 * (H - 1)
    x0 = jnp.floor(ix)
    y0 = jnp.floor(iy)
    x1 = x0 + 1.0
    y1 = y0 + 1.0
    wx1 = ix - x0
    wx0 = 1.0 - wx1
    wy1 = iy - y0
    wy0 = 1.0 - wy1

    def corner(xc, yc, wgt):
        inb = (xc >= 0) & (xc <= W - 1) & (yc >= 0) & (yc <= H - 1)
        wgt = jnp.where(inb, wgt, 0.0)
        xi = jnp.clip(xc, 0, W - 1).astype(jnp.int32)
        yi = jnp.clip(yc, 0, H - 1).astype(jnp.int32)
        return yi * W + xi, wgt

    i00, w00 = corner(x0, y0, wx0 * wy0)
    i10, w10 = corner(x1, y0, wx1 * wy0)
    i01, w01 = corner(x0, y1, wx0 * wy1)
    i11, w11 = corner(x1, y1, wx1 * wy1)
    idx4 = jnp.stack([i00, i10, i01, i11], axis=-1)                 # (N, V, 4)
    w4 = jnp.stack([w00, w10, w01, w11], axis=-1).astype(jnp.float32)
    return idx4, w4


def _gather_sample(feats_flat, idx4, w4):
    """vert_align sampling: gather 4 corner rows of the (HW, C) slab per vertex
    and blend — O(V*C) instead of a dense (V, HW) one-hot matmul."""
    # TODO(synk): could be moved inside the fused kernel with scalar-prefetched
    # corner indices; kept as an XLA gather (negligible vs the gconv work).
    gathered = jax.vmap(lambda f, i: f[i])(feats_flat, idx4)        # (N, V, 4, C)
    return jnp.einsum("nvk,nvkc->nvc", w4, gathered)


def build_mesh_adjacency(edges_packed, N, V):
    """Per-mesh dense adjacency (N, V, V) from a packed undirected edge list."""
    m = edges_packed[:, 0] // V
    i = edges_packed[:, 0] % V
    j = edges_packed[:, 1] % V
    A = jnp.zeros((N, V, V), jnp.float32)
    A = A.at[m, i, j].add(1.0)
    A = A.at[m, j, i].add(1.0)
    return A


def _round_up(x, m):
    return ((x + m - 1) // m) * m


def _split_gconv_weights(layers, hidden, extra_dim):
    """layers: [(w0, b0, w1, b1)], w0/w1: (in_dim, H) with input layout
    [h(H), pos(3), tex(C), prev(...)] (prev only in layer 0).
    Returns W_h (L, H, 2H), W_e (L, extra_dim+1, 2H), W_prev (Dp, 2H) or None."""
    H = hidden
    w_h, w_e, w_p = [], [], None
    for l, (w0, b0, w1, b1) in enumerate(layers):
        w_h.append(jnp.concatenate([w0[:H], w1[:H]], axis=1))
        e0 = jnp.concatenate([w0[H:H + extra_dim], b0[None, :]], axis=0)
        e1 = jnp.concatenate([w1[H:H + extra_dim], b1[None, :]], axis=0)
        w_e.append(jnp.concatenate([e0, e1], axis=1))
        if l == 0 and w0.shape[0] > H + extra_dim:
            w_p = jnp.concatenate([w0[H + extra_dim:], w1[H + extra_dim:]], axis=1)
    return jnp.stack(w_h), jnp.stack(w_e), w_p


def _pack_head_weights(w_off, b_off, w_sem, b_sem, hidden, extra_dim, head_pad, num_classes):
    """Fuse vert_offset (3) + vert_semantic (C) heads into lane-dense 128-wide weights."""
    H, C = hidden, num_classes
    whg = jnp.zeros((H, head_pad), jnp.float32).at[:, 0:3].set(w_off[:H])
    whs = jnp.zeros((H, head_pad), jnp.float32).at[:, 3:3 + C].set(w_sem[:H])
    e_off = jnp.concatenate([w_off[H:H + extra_dim], b_off[None, :]], axis=0)
    e_sem = jnp.concatenate([w_sem[H:H + extra_dim], b_sem[None, :]], axis=0)
    whe = (jnp.zeros((extra_dim + 1, head_pad), jnp.float32)
           .at[:, 0:3].set(e_off).at[:, 3:3 + C].set(e_sem))
    return whg, whs, whe


# ---------------------------- parameters & forward -----------------------------

def init_params(key, img_feat_dim, vert_feat_dim, hidden_dim, num_classes, stage_depth):
    keys = iter(jax.random.split(key, 2 + 4 * stage_depth))

    def normal_w(shape):
        return 0.01 * jax.random.normal(next(keys), shape, jnp.float32)

    params = {
        "bottleneck_w": normal_w((img_feat_dim, hidden_dim)),
        "bottleneck_b": jnp.zeros((hidden_dim,), jnp.float32),
        "bottleneck_sem_w": normal_w((img_feat_dim, hidden_dim)),
        "bottleneck_sem_b": jnp.zeros((hidden_dim,), jnp.float32),
    }
    head_in = hidden_dim + 3 + num_classes
    params["vert_offset_w"] = jnp.zeros((head_in, 3), jnp.float32)       # zeros init (as in module)
    params["vert_offset_b"] = jnp.zeros((3,), jnp.float32)
    params["vert_semantic_w"] = jnp.zeros((head_in, num_classes), jnp.float32)
    params["vert_semantic_b"] = jnp.zeros((num_classes,), jnp.float32)

    for name in ("gconvs", "gconvs_sem"):
        layers = []
        for i in range(stage_depth):
            in_dim = hidden_dim + (vert_feat_dim if i == 0 else 0) + 3 + num_classes
            layers.append((
                normal_w((in_dim, hidden_dim)), jnp.zeros((hidden_dim,), jnp.float32),
                normal_w((in_dim, hidden_dim)), jnp.zeros((hidden_dim,), jnp.float32),
            ))
        params[name] = layers
    return params


def mesh_refinement_stage_forward(params, img_feats, verts_padded, adj, sem_2d, P,
                                  num_vertices, num_classes,
                                  vert_feats_prev=None, vert_sem_feats_prev=None,
                                  vert_offset_threshold=None, sem_residual=True):
    N, V, _ = verts_padded.shape
    C = num_classes
    H = params["bottleneck_w"].shape[1]
    Ci, Hh, Ww = img_feats.shape[1], img_feats.shape[2], img_feats.shape[3]
    HW = Hh * Ww

    # Hoisted (N, HW, C) slabs, computed once and reused by every vert_align call.
    img_flat = jnp.transpose(img_feats.reshape(N, Ci, HW), (0, 2, 1))
    sem_flat = jnp.transpose(sem_2d.reshape(N, C, HW), (0, 2, 1))

    # Projected positions for sampling; un-projected positions as vertex features.
    vert_pos_padded = project_verts(verts_padded, P)
    idx4, w4 = _bilinear_corners(vert_pos_padded[..., :2], Hh, Ww)
    tex = _gather_sample(sem_flat, idx4, w4)           # textures (N, V, C)
    va_img = _gather_sample(img_flat, idx4, w4)        # (N, V, Ci)

    ones = jnp.ones((N, V, 1), jnp.float32)
    extras_aug = jnp.concatenate([verts_padded, tex, ones], axis=-1)   # (N, V, 3+C+1)
    va_aug = jnp.concatenate([va_img, ones], axis=-1)                  # (N, V, Ci+1)

    # Split-weight packing ("concat then matmul" -> partial matmuls).
    bw_aug = jnp.concatenate([
        jnp.concatenate([params["bottleneck_w"], params["bottleneck_sem_w"]], axis=1),
        jnp.concatenate([params["bottleneck_b"], params["bottleneck_sem_b"]])[None, :],
    ], axis=0)                                                          # (Ci+1, 2H)

    extra_dim = 3 + C
    w_h_geo, w_e_geo, w_p_geo = _split_gconv_weights(params["gconvs"], H, extra_dim)
    w_h_sem, w_e_sem, w_p_sem = _split_gconv_weights(params["gconvs_sem"], H, extra_dim)

    head_pad = _round_up(3 + C, 128)
    w_head_g, w_head_s, w_head_e = _pack_head_weights(
        params["vert_offset_w"], params["vert_offset_b"],
        params["vert_semantic_w"], params["vert_semantic_b"],
        H, extra_dim, head_pad, C)

    prev_geo = None if vert_feats_prev is None else vert_feats_prev.reshape(N, V, -1)
    sem_prev_list = [x for x in (vert_feats_prev, vert_sem_feats_prev) if x is not None]
    prev_sem = (jnp.concatenate(sem_prev_list, axis=-1).reshape(N, V, -1)
                if sem_prev_list else None)

    head_out, hgeo, hsem = mesh_stage_fused(
        adj, extras_aug, va_aug, bw_aug,
        w_h_geo, w_e_geo, w_h_sem, w_e_sem,
        w_head_g, w_head_s, w_head_e,
        prev_geo=prev_geo, w_p_geo=w_p_geo,
        prev_sem=prev_sem, w_p_sem=w_p_sem,
        hidden=H, head_pad=head_pad)

    vert_offsets = head_out[..., 0:3]                                   # (N, V, 3)
    vert_offsets = jnp.where(jnp.isnan(vert_offsets), 0.0, vert_offsets)
    if vert_offset_threshold is not None:
        # matches the module: only offsets ABOVE the threshold are clamped
        vert_offsets = jnp.where(vert_offsets > vert_offset_threshold,
                                 vert_offset_threshold, vert_offsets)
    verts_out_padded = verts_padded + vert_offsets

    meshes_textures = head_out[..., 3:3 + C]                            # (N, num_vertices, C)

    # Re-sample semantics at the refined (offset) vertex positions.
    vert_pos_out = project_verts(verts_out_padded, P)
    idx4o, w4o = _bilinear_corners(vert_pos_out[..., :2], Hh, Ww)
    vert_align_sem_out = _gather_sample(sem_flat, idx4o, w4o)
    textures_out = (vert_align_sem_out + meshes_textures if sem_residual
                    else meshes_textures)

    vert_feats_nopos = hgeo.reshape(N * V, H)
    vert_sem_feats_nopos = hsem.reshape(N * V, H)
    return verts_out_padded, textures_out, vert_feats_nopos, vert_sem_feats_nopos


# ------------------------------------- main -------------------------------------

if __name__ == "__main__":
    key = jax.random.PRNGKey(0)
    N, V = 2, 16
    img_feat_dim, hidden_dim, num_classes, stage_depth = 32, 32, 4, 2
    vert_feat_dim = 0
    Himg = Wimg = 16

    k_img, k_sem, k_xy, k_z, k_par = jax.random.split(key, 5)
    img_feats = jax.random.normal(k_img, (N, img_feat_dim, Himg, Wimg), jnp.float32)
    sem_2d = jax.random.normal(k_sem, (N, num_classes, Himg, Wimg), jnp.float32)
    xy = jax.random.uniform(k_xy, (N, V, 2), jnp.float32, -0.8, 0.8)
    z = jax.random.uniform(k_z, (N, V, 1), jnp.float32, 0.5, 1.5)
    verts_padded = jnp.concatenate([xy, z], axis=-1)                     # (N, V, 3)
    P = jnp.tile(jnp.eye(4, dtype=jnp.float32)[None], (N, 1, 1))         # (N, 4, 4)

    # ring-graph edges per mesh (unique undirected pairs, packed vertex indexing)
    base = jnp.arange(V, dtype=jnp.int32)
    e0 = jnp.concatenate([m * V + base for m in range(N)])
    e1 = jnp.concatenate([m * V + (base + 1) % V for m in range(N)])
    edges_packed = jnp.stack([e0, e1], axis=1)                           # (N*V, 2)
    adj = build_mesh_adjacency(edges_packed, N, V)                       # (N, V, V)

    params = init_params(k_par, img_feat_dim, vert_feat_dim, hidden_dim,
                         num_classes, stage_depth)

    outs = mesh_refinement_stage_forward(
        params, img_feats, verts_padded, adj, sem_2d, P,
        num_vertices=V, num_classes=num_classes,
        vert_feats_prev=None, vert_sem_feats_prev=None,
        vert_offset_threshold=None, sem_residual=True)

    jax.block_until_ready(outs)
    print("KERNEL_OK")
</pallas_src>

<mosaic_0001>
module attributes {stable_mosaic.version = 11 : i64} {
  func.func @_stage_kernel(%arg0: i32, %arg1: memref<1x16x16xf32, #tpu.memory_space<vmem>>, %arg2: memref<1x16x8xf32, #tpu.memory_space<vmem>>, %arg3: memref<1x16x33xf32, #tpu.memory_space<vmem>>, %arg4: memref<33x64xf32, #tpu.memory_space<vmem>>, %arg5: memref<2x32x64xf32, #tpu.memory_space<vmem>>, %arg6: memref<2x8x64xf32, #tpu.memory_space<vmem>>, %arg7: memref<2x32x64xf32, #tpu.memory_space<vmem>>, %arg8: memref<2x8x64xf32, #tpu.memory_space<vmem>>, %arg9: memref<32x128xf32, #tpu.memory_space<vmem>>, %arg10: memref<32x128xf32, #tpu.memory_space<vmem>>, %arg11: memref<8x128xf32, #tpu.memory_space<vmem>>, %arg12: memref<1x16x128xf32, #tpu.memory_space<vmem>>, %arg13: memref<1x16x32xf32, #tpu.memory_space<vmem>>, %arg14: memref<1x16x32xf32, #tpu.memory_space<vmem>>) attributes {dimension_semantics = [#tpu.dimension_semantics<parallel>], iteration_bounds = array<i64: 2>, scalar_prefetch = 0 : i64, scratch_operands = 0 : i64, tpu.core_type = #tpu.core_type<tc>, window_params = [{transform_indices = @transform_0, window_bounds = array<i64: 1, 16, 16>}, {transform_indices = @transform_1, window_bounds = array<i64: 1, 16, 8>}, {transform_indices = @transform_2, window_bounds = array<i64: 1, 16, 33>}, {pipeline_mode = #tpu.pipeline_mode<synchronous>, transform_indices = @transform_3, window_bounds = array<i64: 33, 64>}, {pipeline_mode = #tpu.pipeline_mode<synchronous>, transform_indices = @transform_4, window_bounds = array<i64: 2, 32, 64>}, {pipeline_mode = #tpu.pipeline_mode<synchronous>, transform_indices = @transform_5, window_bounds = array<i64: 2, 8, 64>}, {pipeline_mode = #tpu.pipeline_mode<synchronous>, transform_indices = @transform_6, window_bounds = array<i64: 2, 32, 64>}, {pipeline_mode = #tpu.pipeline_mode<synchronous>, transform_indices = @transform_7, window_bounds = array<i64: 2, 8, 64>}, {pipeline_mode = #tpu.pipeline_mode<synchronous>, transform_indices = @transform_8, window_bounds = array<i64: 32, 128>}, {pipeline_mode = #tpu.pipeline_mode<synchronous>, transform_indices = @transform_9, window_bounds = array<i64: 32, 128>}, {pipeline_mode = #tpu.pipeline_mode<synchronous>, transform_indices = @transform_10, window_bounds = array<i64: 8, 128>}, {transform_indices = @transform_11, window_bounds = array<i64: 1, 16, 128>}, {transform_indices = @transform_12, window_bounds = array<i64: 1, 16, 32>}, {transform_indices = @transform_13, window_bounds = array<i64: 1, 16, 32>}]} {
    %c0 = arith.constant 0 : index
    %c0_0 = arith.constant 0 : index
    %c0_1 = arith.constant 0 : index
    %0 = vector.load %arg1[%c0, %c0_0, %c0_1] : memref<1x16x16xf32, #tpu.memory_space<vmem>>, vector<1x16x16xf32>
    %1 = vector.shape_cast %0 : vector<1x16x16xf32> to vector<16x16xf32>
    %c0_2 = arith.constant 0 : index
    %c0_3 = arith.constant 0 : index
    %c0_4 = arith.constant 0 : index
    %2 = vector.load %arg2[%c0_2, %c0_3, %c0_4] : memref<1x16x8xf32, #tpu.memory_space<vmem>>, vector<1x16x8xf32>
    %3 = vector.shape_cast %2 : vector<1x16x8xf32> to vector<16x8xf32>
    %c0_5 = arith.constant 0 : index
    %c0_6 = arith.constant 0 : index
    %c0_7 = arith.constant 0 : index
    %4 = vector.load %arg3[%c0_5, %c0_6, %c0_7] : memref<1x16x33xf32, #tpu.memory_space<vmem>>, vector<1x16x33xf32>
    %5 = vector.shape_cast %4 : vector<1x16x33xf32> to vector<16x33xf32>
    %c0_8 = arith.constant 0 : index
    %c0_9 = arith.constant 0 : index
    %6 = vector.load %arg4[%c0_8, %c0_9] : memref<33x64xf32, #tpu.memory_space<vmem>>, vector<33x64xf32>
    %cst = arith.constant dense<0.000000e+00> : vector<16x64xf32>
    %7 = tpu.matmul %5, %6, %cst {dimension_numbers = #tpu.dot_dimension_numbers<[1], [0], [0], [1], [0, 0, 1, 1], [], []>} : vector<16x33xf32>, vector<33x64xf32>, vector<16x64xf32> -> vector<16x64xf32>
    %cst_10 = arith.constant 0.000000e+00 : f32
    %8 = vector.broadcast %cst_10 : f32 to vector<16x64xf32>
    %9 = arith.maximumf %7, %8 : vector<16x64xf32>
    %10 = vector.extract_strided_slice %9 {offsets = [0, 0], sizes = [16, 32], strides = [1, 1]} : vector<16x64xf32> to vector<16x32xf32>
    %11 = vector.extract_strided_slice %9 {offsets = [0, 32], sizes = [16, 32], strides = [1, 1]} : vector<16x64xf32> to vector<16x32xf32>
    %c0_11 = arith.constant 0 : index
    %c0_12 = arith.constant 0 : index
    %c0_13 = arith.constant 0 : index
    %12 = vector.load %arg5[%c0_11, %c0_12, %c0_13] : memref<2x32x64xf32, #tpu.memory_space<vmem>>, vector<1x32x64xf32>
    %13 = vector.shape_cast %12 : vector<1x32x64xf32> to vector<32x64xf32>
    %cst_14 = arith.constant dense<0.000000e+00> : vector<16x64xf32>
    %14 = tpu.matmul %10, %13, %cst_14 {dimension_numbers = #tpu.dot_dimension_numbers<[1], [0], [0], [1], [0, 0, 1, 1], [], []>} : vector<16x32xf32>, vector<32x64xf32>, vector<16x64xf32> -> vector<16x64xf32>
    %c0_15 = arith.constant 0 : index
    %c0_16 = arith.constant 0 : index
    %c0_17 = arith.constant 0 : index
    %15 = vector.load %arg6[%c0_15, %c0_16, %c0_17] : memref<2x8x64xf32, #tpu.memory_space<vmem>>, vector<1x8x64xf32>
    %16 = vector.shape_cast %15 : vector<1x8x64xf32> to vector<8x64xf32>
    %cst_18 = arith.constant dense<0.000000e+00> : vector<16x64xf32>
    %17 = tpu.matmul %3, %16, %cst_18 {dimension_numbers = #tpu.dot_dimension_numbers<[1], [0], [0], [1], [0, 0, 1, 1], [], []>} : vector<16x8xf32>, vector<8x64xf32>, vector<16x64xf32> -> vector<16x64xf32>
    %18 = arith.addf %14, %17 : vector<16x64xf32>
    %c0_19 = arith.constant 0 : index
    %c0_20 = arith.constant 0 : index
    %c0_21 = arith.constant 0 : index
    %19 = vector.load %arg7[%c0_19, %c0_20, %c0_21] : memref<2x32x64xf32, #tpu.memory_space<vmem>>, vector<1x32x64xf32>
    %20 = vector.shape_cast %19 : vector<1x32x64xf32> to vector<32x64xf32>
    %cst_22 = arith.constant dense<0.000000e+00> : vector<16x64xf32>
    %21 = tpu.matmul %11, %20, %cst_22 {dimension_numbers = #tpu.dot_dimension_numbers<[1], [0], [0], [1], [0, 0, 1, 1], [], []>} : vector<16x32xf32>, vector<32x64xf32>, vector<16x64xf32> -> vector<16x64xf32>
    %c0_23 = arith.constant 0 : index
    %c0_24 = arith.constant 0 : index
    %c0_25 = arith.constant 0 : index
    %22 = vector.load %arg8[%c0_23, %c0_24, %c0_25] : memref<2x8x64xf32, #tpu.memory_space<vmem>>, vector<1x8x64xf32>
    %23 = vector.shape_cast %22 : vector<1x8x64xf32> to vector<8x64xf32>
    %cst_26 = arith.constant dense<0.000000e+00> : vector<16x64xf32>
    %24 = tpu.matmul %3, %23, %cst_26 {dimension_numbers = #tpu.dot_dimension_numbers<[1], [0], [0], [1], [0, 0, 1, 1], [], []>} : vector<16x8xf32>, vector<8x64xf32>, vector<16x64xf32> -> vector<16x64xf32>
    %25 = arith.addf %21, %24 : vector<16x64xf32>
    %26 = vector.extract_strided_slice %18 {offsets = [0, 0], sizes = [16, 32], strides = [1, 1]} : vector<16x64xf32> to vector<16x32xf32>
    %27 = vector.extract_strided_slice %18 {offsets = [0, 32], sizes = [16, 32], strides = [1, 1]} : vector<16x64xf32> to vector<16x32xf32>
    %cst_27 = arith.constant dense<0.000000e+00> : vector<16x32xf32>
    %28 = tpu.matmul %1, %27, %cst_27 {dimension_numbers = #tpu.dot_dimension_numbers<[1], [0], [0], [1], [0, 0, 1, 1], [], []>} : vector<16x16xf32>, vector<16x32xf32>, vector<16x32xf32> -> vector<16x32xf32>
    %29 = arith.addf %26, %28 : vector<16x32xf32>
    %cst_28 = arith.constant 0.000000e+00 : f32
    %30 = vector.broadcast %cst_28 : f32 to vector<16x32xf32>
    %31 = arith.maximumf %29, %30 : vector<16x32xf32>
    %32 = vector.extract_strided_slice %25 {offsets = [0, 0], sizes = [16, 32], strides = [1, 1]} : vector<16x64xf32> to vector<16x32xf32>
    %33 = vector.extract_strided_slice %25 {offsets = [0, 32], sizes = [16, 32], strides = [1, 1]} : vector<16x64xf32> to vector<16x32xf32>
    %cst_29 = arith.constant dense<0.000000e+00> : vector<16x32xf32>
    %34 = tpu.matmul %1, %33, %cst_29 {dimension_numbers = #tpu.dot_dimension_numbers<[1], [0], [0], [1], [0, 0, 1, 1], [], []>} : vector<16x16xf32>, vector<16x32xf32>, vector<16x32xf32> -> vector<16x32xf32>
    %35 = arith.addf %32, %34 : vector<16x32xf32>
    %cst_30 = arith.constant 0.000000e+00 : f32
    %36 = vector.broadcast %cst_30 : f32 to vector<16x32xf32>
    %37 = arith.maximumf %35, %36 : vector<16x32xf32>
    %c1 = arith.constant 1 : index
    %c0_31 = arith.constant 0 : index
    %c0_32 = arith.constant 0 : index
    %38 = vector.load %arg5[%c1, %c0_31, %c0_32] : memref<2x32x64xf32, #tpu.memory_space<vmem>>, vector<1x32x64xf32>
    %39 = vector.shape_cast %38 : vector<1x32x64xf32> to vector<32x64xf32>
    %cst_33 = arith.constant dense<0.000000e+00> : vector<16x64xf32>
    %40 = tpu.matmul %31, %39, %cst_33 {dimension_numbers = #tpu.dot_dimension_numbers<[1], [0], [0], [1], [0, 0, 1, 1], [], []>} : vector<16x32xf32>, vector<32x64xf32>, vector<16x64xf32> -> vector<16x64xf32>
    %c1_34 = arith.constant 1 : index
    %c0_35 = arith.constant 0 : index
    %c0_36 = arith.constant 0 : index
    %41 = vector.load %arg6[%c1_34, %c0_35, %c0_36] : memref<2x8x64xf32, #tpu.memory_space<vmem>>, vector<1x8x64xf32>
    %42 = vector.shape_cast %41 : vector<1x8x64xf32> to vector<8x64xf32>
    %cst_37 = arith.constant dense<0.000000e+00> : vector<16x64xf32>
    %43 = tpu.matmul %3, %42, %cst_37 {dimension_numbers = #tpu.dot_dimension_numbers<[1], [0], [0], [1], [0, 0, 1, 1], [], []>} : vector<16x8xf32>, vector<8x64xf32>, vector<16x64xf32> -> vector<16x64xf32>
    %44 = arith.addf %40, %43 : vector<16x64xf32>
    %c1_38 = arith.constant 1 : index
    %c0_39 = arith.constant 0 : index
    %c0_40 = arith.constant 0 : index
    %45 = vector.load %arg7[%c1_38, %c0_39, %c0_40] : memref<2x32x64xf32, #tpu.memory_space<vmem>>, vector<1x32x64xf32>
    %46 = vector.shape_cast %45 : vector<1x32x64xf32> to vector<32x64xf32>
    %cst_41 = arith.constant dense<0.000000e+00> : vector<16x64xf32>
    %47 = tpu.matmul %37, %46, %cst_41 {dimension_numbers = #tpu.dot_dimension_numbers<[1], [0], [0], [1], [0, 0, 1, 1], [], []>} : vector<16x32xf32>, vector<32x64xf32>, vector<16x64xf32> -> vector<16x64xf32>
    %c1_42 = arith.constant 1 : index
    %c0_43 = arith.constant 0 : index
    %c0_44 = arith.constant 0 : index
    %48 = vector.load %arg8[%c1_42, %c0_43, %c0_44] : memref<2x8x64xf32, #tpu.memory_space<vmem>>, vector<1x8x64xf32>
    %49 = vector.shape_cast %48 : vector<1x8x64xf32> to vector<8x64xf32>
    %cst_45 = arith.constant dense<0.000000e+00> : vector<16x64xf32>
    %50 = tpu.matmul %3, %49, %cst_45 {dimension_numbers = #tpu.dot_dimension_numbers<[1], [0], [0], [1], [0, 0, 1, 1], [], []>} : vector<16x8xf32>, vector<8x64xf32>, vector<16x64xf32> -> vector<16x64xf32>
    %51 = arith.addf %47, %50 : vector<16x64xf32>
    %52 = vector.extract_strided_slice %44 {offsets = [0, 0], sizes = [16, 32], strides = [1, 1]} : vector<16x64xf32> to vector<16x32xf32>
    %53 = vector.extract_strided_slice %44 {offsets = [0, 32], sizes = [16, 32], strides = [1, 1]} : vector<16x64xf32> to vector<16x32xf32>
    %cst_46 = arith.constant dense<0.000000e+00> : vector<16x32xf32>
    %54 = tpu.matmul %1, %53, %cst_46 {dimension_numbers = #tpu.dot_dimension_numbers<[1], [0], [0], [1], [0, 0, 1, 1], [], []>} : vector<16x16xf32>, vector<16x32xf32>, vector<16x32xf32> -> vector<16x32xf32>
    %55 = arith.addf %52, %54 : vector<16x32xf32>
    %cst_47 = arith.constant 0.000000e+00 : f32
    %56 = vector.broadcast %cst_47 : f32 to vector<16x32xf32>
    %57 = arith.maximumf %55, %56 : vector<16x32xf32>
    %58 = vector.extract_strided_slice %51 {offsets = [0, 0], sizes = [16, 32], strides = [1, 1]} : vector<16x64xf32> to vector<16x32xf32>
    %59 = vector.extract_strided_slice %51 {offsets = [0, 32], sizes = [16, 32], strides = [1, 1]} : vector<16x64xf32> to vector<16x32xf32>
    %cst_48 = arith.constant dense<0.000000e+00> : vector<16x32xf32>
    %60 = tpu.matmul %1, %59, %cst_48 {dimension_numbers = #tpu.dot_dimension_numbers<[1], [0], [0], [1], [0, 0, 1, 1], [], []>} : vector<16x16xf32>, vector<16x32xf32>, vector<16x32xf32> -> vector<16x32xf32>
    %61 = arith.addf %58, %60 : vector<16x32xf32>
    %cst_49 = arith.constant 0.000000e+00 : f32
    %62 = vector.broadcast %cst_49 : f32 to vector<16x32xf32>
    %63 = arith.maximumf %61, %62 : vector<16x32xf32>
    %c0_50 = arith.constant 0 : index
    %c0_51 = arith.constant 0 : index
    %64 = vector.load %arg9[%c0_50, %c0_51] : memref<32x128xf32, #tpu.memory_space<vmem>>, vector<32x128xf32>
    %cst_52 = arith.constant dense<0.000000e+00> : vector<16x128xf32>
    %65 = tpu.matmul %57, %64, %cst_52 {dimension_numbers = #tpu.dot_dimension_numbers<[1], [0], [0], [1], [0, 0, 1, 1], [], []>} : vector<16x32xf32>, vector<32x128xf32>, vector<16x128xf32> -> vector<16x128xf32>
    %c0_53 = arith.constant 0 : index
    %c0_54 = arith.constant 0 : index
    %66 = vector.load %arg10[%c0_53, %c0_54] : memref<32x128xf32, #tpu.memory_space<vmem>>, vector<32x128xf32>
    %cst_55 = arith.constant dense<0.000000e+00> : vector<16x128xf32>
    %67 = tpu.matmul %63, %66, %cst_55 {dimension_numbers = #tpu.dot_dimension_numbers<[1], [0], [0], [1], [0, 0, 1, 1], [], []>} : vector<16x32xf32>, vector<32x128xf32>, vector<16x128xf32> -> vector<16x128xf32>
    %68 = arith.addf %65, %67 : vector<16x128xf32>
    %c0_56 = arith.constant 0 : index
    %c0_57 = arith.constant 0 : index
    %69 = vector.load %arg11[%c0_56, %c0_57] : memref<8x128xf32, #tpu.memory_space<vmem>>, vector<8x128xf32>
    %cst_58 = arith.constant dense<0.000000e+00> : vector<16x128xf32>
    %70 = tpu.matmul %3, %69, %cst_58 {dimension_numbers = #tpu.dot_dimension_numbers<[1], [0], [0], [1], [0, 0, 1, 1], [], []>} : vector<16x8xf32>, vector<8x128xf32>, vector<16x128xf32> -> vector<16x128xf32>
    %71 = arith.addf %68, %70 : vector<16x128xf32>
    %c0_59 = arith.constant 0 : index
    %c0_60 = arith.constant 0 : index
    %c0_61 = arith.constant 0 : index
    %72 = vector.load %arg12[%c0_59, %c0_60, %c0_61] : memref<1x16x128xf32, #tpu.memory_space<vmem>>, vector<1x16x128xf32>
    %73 = vector.shape_cast %72 : vector<1x16x128xf32> to vector<16x128xf32>
    %74 = vector.shape_cast %71 : vector<16x128xf32> to vector<1x16x128xf32>
    tpu.vector_store %arg12[%c0_59, %c0_60, %c0_61], %74 {strides = array<i32>} : memref<1x16x128xf32, #tpu.memory_space<vmem>>, vector<1x16x128xf32>,
    %c0_62 = arith.constant 0 : index
    %c0_63 = arith.constant 0 : index
    %c0_64 = arith.constant 0 : index
    %75 = vector.load %arg13[%c0_62, %c0_63, %c0_64] : memref<1x16x32xf32, #tpu.memory_space<vmem>>, vector<1x16x32xf32>
    %76 = vector.shape_cast %75 : vector<1x16x32xf32> to vector<16x32xf32>
    %77 = vector.shape_cast %57 : vector<16x32xf32> to vector<1x16x32xf32>
    tpu.vector_store %arg13[%c0_62, %c0_63, %c0_64], %77 {strides = array<i32>} : memref<1x16x32xf32, #tpu.memory_space<vmem>>, vector<1x16x32xf32>,
    %c0_65 = arith.constant 0 : index
    %c0_66 = arith.constant 0 : index
    %c0_67 = arith.constant 0 : index
    %78 = vector.load %arg14[%c0_65, %c0_66, %c0_67] : memref<1x16x32xf32, #tpu.memory_space<vmem>>, vector<1x16x32xf32>
    %79 = vector.shape_cast %78 : vector<1x16x32xf32> to vector<16x32xf32>
    %80 = vector.shape_cast %63 : vector<16x32xf32> to vector<1x16x32xf32>
    tpu.vector_store %arg14[%c0_65, %c0_66, %c0_67], %80 {strides = array<i32>} : memref<1x16x32xf32, #tpu.memory_space<vmem>>, vector<1x16x32xf32>,
    return
  }
  func.func @transform_0(%arg0: i32) -> (i32, i32, i32) {
    %c0_i32 = arith.constant 0 : i32
    %c0_i32_0 = arith.constant 0 : i32
    %c0_i32_1 = arith.constant 0 : i32
    return %arg0, %c0_i32, %c0_i32_0 : i32, i32, i32
  }
  func.func @transform_1(%arg0: i32) -> (i32, i32, i32) {
    %c0_i32 = arith.constant 0 : i32
    %c0_i32_0 = arith.constant 0 : i32
    %c0_i32_1 = arith.constant 0 : i32
    return %arg0, %c0_i32, %c0_i32_0 : i32, i32, i32
  }
  func.func @transform_2(%arg0: i32) -> (i32, i32, i32) {
    %c0_i32 = arith.constant 0 : i32
    %c0_i32_0 = arith.constant 0 : i32
    %c0_i32_1 = arith.constant 0 : i32
    return %arg0, %c0_i32, %c0_i32_0 : i32, i32, i32
  }
  func.func @transform_3(%arg0: i32) -> (i32, i32) {
    %c0_i32 = arith.constant 0 : i32
    %c0_i32_0 = arith.constant 0 : i32
    %c0_i32_1 = arith.constant 0 : i32
    return %c0_i32, %c0_i32_0 : i32, i32
  }
  func.func @transform_4(%arg0: i32) -> (i32, i32, i32) {
    %c0_i32 = arith.constant 0 : i32
    %c0_i32_0 = arith.constant 0 : i32
    %c0_i32_1 = arith.constant 0 : i32
    %c0_i32_2 = arith.constant 0 : i32
    return %c0_i32, %c0_i32_0, %c0_i32_1 : i32, i32, i32
  }
  func.func @transform_5(%arg0: i32) -> (i32, i32, i32) {
    %c0_i32 = arith.constant 0 : i32
    %c0_i32_0 = arith.constant 0 : i32
    %c0_i32_1 = arith.constant 0 : i32
    %c0_i32_2 = arith.constant 0 : i32
    return %c0_i32, %c0_i32_0, %c0_i32_1 : i32, i32, i32
  }
  func.func @transform_6(%arg0: i32) -> (i32, i32, i32) {
    %c0_i32 = arith.constant 0 : i32
    %c0_i32_0 = arith.constant 0 : i32
    %c0_i32_1 = arith.constant 0 : i32
    %c0_i32_2 = arith.constant 0 : i32
    return %c0_i32, %c0_i32_0, %c0_i32_1 : i32, i32, i32
  }
  func.func @transform_7(%arg0: i32) -> (i32, i32, i32) {
    %c0_i32 = arith.constant 0 : i32
    %c0_i32_0 = arith.constant 0 : i32
    %c0_i32_1 = arith.constant 0 : i32
    %c0_i32_2 = arith.constant 0 : i32
    return %c0_i32, %c0_i32_0, %c0_i32_1 : i32, i32, i32
  }
  func.func @transform_8(%arg0: i32) -> (i32, i32) {
    %c0_i32 = arith.constant 0 : i32
    %c0_i32_0 = arith.constant 0 : i32
    %c0_i32_1 = arith.constant 0 : i32
    return %c0_i32, %c0_i32_0 : i32, i32
  }
  func.func @transform_9(%arg0: i32) -> (i32, i32) {
    %c0_i32 = arith.constant 0 : i32
    %c0_i32_0 = arith.constant 0 : i32
    %c0_i32_1 = arith.constant 0 : i32
    return %c0_i32, %c0_i32_0 : i32, i32
  }
  func.func @transform_10(%arg0: i32) -> (i32, i32) {
    %c0_i32 = arith.constant 0 : i32
    %c0_i32_0 = arith.constant 0 : i32
    %c0_i32_1 = arith.constant 0 : i32
    return %c0_i32, %c0_i32_0 : i32, i32
  }
  func.func @transform_11(%arg0: i32) -> (i32, i32, i32) {
    %c0_i32 = arith.constant 0 : i32
    %c0_i32_0 = arith.constant 0 : i32
    %c0_i32_1 = arith.constant 0 : i32
    return %arg0, %c0_i32, %c0_i32_0 : i32, i32, i32
  }
  func.func @transform_12(%arg0: i32) -> (i32, i32, i32) {
    %c0_i32 = arith.constant 0 : i32
    %c0_i32_0 = arith.constant 0 : i32
    %c0_i32_1 = arith.constant 0 : i32
    return %arg0, %c0_i32, %c0_i32_0 : i32, i32, i32
  }
  func.func @transform_13(%arg0: i32) -> (i32, i32, i32) {
    %c0_i32 = arith.constant 0 : i32
    %c0_i32_0 = arith.constant 0 : i32
    %c0_i32_1 = arith.constant 0 : i32
    return %arg0, %c0_i32, %c0_i32_0 : i32, i32, i32
  }
}

</mosaic_0001>

<llo_original>
// kernel: tpu_custom_call.1
$region0: #{tpu_custom_call.1}
  #allocation0 [shape = 'u32[]', space=smem, size = 0x4, offset = 0x4, fixed_abs, tag = 'smem constant byte address 0x4 - core index']
  #allocation1 [shape = 'u32[72,128]{1,0:T(1,128)}', space=vmem, size = 0x9000, scoped, tag = 'internal scratch']
  %s0 = inlined_call_operand.hbm [shape: f32[2,16,16], index: 0, kind: input, shape index: {}]
  %s1 = inlined_call_operand.vmem [shape: f32[2,16,8], index: 1, kind: input, shape index: {}]
  %s2 = inlined_call_operand.hbm [shape: f32[2,16,33], index: 2, kind: input, shape index: {}]
  %s3 = inlined_call_operand.vmem [shape: f32[33,64], index: 3, kind: input, shape index: {}]
  %s4 = inlined_call_operand.hbm [shape: f32[2,32,64], index: 4, kind: input, shape index: {}]
  %s5 = inlined_call_operand.hbm [shape: f32[2,8,64], index: 5, kind: input, shape index: {}]
  %s6 = inlined_call_operand.hbm [shape: f32[2,32,64], index: 6, kind: input, shape index: {}]
  %s7 = inlined_call_operand.hbm [shape: f32[2,8,64], index: 7, kind: input, shape index: {}]
  %s8 = inlined_call_operand.hbm [shape: f32[32,128], index: 8, kind: input, shape index: {}]
  %s9 = inlined_call_operand.hbm [shape: f32[32,128], index: 9, kind: input, shape index: {}]
  %s10 = inlined_call_operand.vmem [shape: f32[8,128], index: 10, kind: input, shape index: {}]
  %s11 = inlined_call_operand.hbm [shape: f32[2,16,128], index: 11, kind: output, shape index: {0}]
  %s12 = inlined_call_operand.hbm [shape: f32[2,16,32], index: 12, kind: output, shape index: {1}]
  %s13 = inlined_call_operand.hbm [shape: f32[2,16,32], index: 13, kind: output, shape index: {2}]
  %14 = xla_tuple %s11, %s12, %s13
  %s15 = sld [smem:[#allocation0]]
  $region125: #{tpu_custom_call.1} parent=0
    _
  %s17 = ssub.s32 1, %s15
  %s18 = scalar_select 0, %s17, %s15
  $region1: #{tpu_custom_call.1} parent=0
    #allocation2 [shape = 'u8[16384]{0}', space=vmem, size = 0x4000, scoped, tag = 'input window, operand 0']
    #allocation3 [shape = 's32[2]{0}', space=sflag, size = 0x8, scoped, tag = 'scoped memory for tpu_custom_call.1']
    #allocation4 [shape = 's32[2]{0}', space=sflag, size = 0x8, scoped, tag = 'scoped memory for tpu_custom_call.1']
    #allocation5 [shape = 'u8[16384]{0}', space=vmem, size = 0x4000, scoped, tag = 'input window, operand 2']
    #allocation6 [shape = 's32[2]{0}', space=sflag, size = 0x8, scoped, tag = 'scoped memory for tpu_custom_call.1']
    #allocation7 [shape = 'u8[32768]{0}', space=vmem, size = 0x8000, scoped, tag = 'input window, operand 4, single buffered']
    #allocation8 [shape = 'u8[8192]{0}', space=vmem, size = 0x2000, scoped, tag = 'input window, operand 5, single buffered']
    #allocation9 [shape = 's32[1]{0}', space=sflag, size = 0x4, scoped, tag = 'scoped memory for tpu_custom_call.1']
    #allocation10 [shape = 'u8[32768]{0}', space=vmem, size = 0x8000, scoped, tag = 'input window, operand 6, single buffered']
    #allocation11 [shape = 'u8[8192]{0}', space=vmem, size = 0x2000, scoped, tag = 'input window, operand 7, single buffered']
    #allocation12 [shape = 's32[1]{0}', space=sflag, size = 0x4, scoped, tag = 'scoped memory for tpu_custom_call.1']
    #allocation13 [shape = 'u8[16384]{0}', space=vmem, size = 0x4000, scoped, tag = 'input window, operand 8, single buffered']
    #allocation14 [shape = 'u8[16384]{0}', space=vmem, size = 0x4000, scoped, tag = 'input window, operand 9, single buffered']
    #allocation15 [shape = 's32[1]{0}', space=sflag, size = 0x4, scoped, tag = 'scoped memory for tpu_custom_call.1']
    #allocation16 [shape = 'u8[16384]{0}', space=vmem, size = 0x4000, scoped, tag = 'output window, operand 0']
    #allocation17 [shape = 'u8[16384]{0}', space=vmem, size = 0x4000, scoped, tag = 'output window, operand 1']
    #allocation18 [shape = 's32[2]{0}', space=sflag, size = 0x8, scoped, tag = 'scoped memory for tpu_custom_call.1']
    #allocation19 [shape = 'u8[16384]{0}', space=vmem, size = 0x4000, scoped, tag = 'output window, operand 2']
    %19 = vsyncpa [#allocation3], 0
    %s20 = scalar_lea.sflag [#allocation3], 1
    %21 = vsyncpa %s20, 0
    %22 = vsyncpa [#allocation6], 0
    %s23 = scalar_lea.sflag [#allocation6], 1
    %24 = vsyncpa %s23, 0
    %25 = vsyncpa [#allocation9], 0
    %26 = vsyncpa [#allocation12], 0
    %27 = vsyncpa [#allocation15], 0
    %28 = vsyncpa [#allocation4], 0
    %s29 = scalar_lea.sflag [#allocation4], 1
    %30 = vsyncpa %s29, 0
    %31 = vsyncpa [#allocation18], 0
    %s32 = scalar_lea.sflag [#allocation18], 1
    %33 = vsyncpa %s32, 0
    loop: start=0, step=1, limit=4
    $region2: #{tpu_custom_call.1} parent=1 // loop_pre_header
      _
    $region3: #{tpu_custom_call.1} parent=1 // loop_header
      %s35 = sphi 0, %s39
      %p36 = scmp.ge.s32.totalorder %s35, 4
      %s45 = sphi 0, %s47
      %s48 = sphi 0, %s45
      %s49 = sphi 0, %s48
      %s65 = sphi 0, %s49
      %s71 = sphi 0, %s73
      %s74 = sphi 0, %s71
      %s75 = sphi 0, %s74
      %s91 = sphi 0, %s75
      %s97 = sphi 0, %s99
      %s100 = sphi 0, %s97
      %s101 = sphi 0, %s100
      %s117 = sphi 0, %s101
      %s121 = sphi 0, %s121
      %s123 = sphi 0, %s121
      %s124 = sphi 0, %s123
      %s138 = sphi 0, %s124
      %s142 = sphi 0, %s142
      %s144 = sphi 0, %s142
      %s145 = sphi 0, %s144
      %s159 = sphi 0, %s145
      %s163 = sphi 0, %s163
      %s165 = sphi 0, %s163
      %s166 = sphi 0, %s165
      %s180 = sphi 0, %s166
      %s184 = sphi 0, %s184
      %s186 = sphi 0, %s184
      %s187 = sphi 0, %s186
      %s201 = sphi 0, %s187
      %s205 = sphi 0, %s205
      %s207 = sphi 0, %s205
      %s208 = sphi 0, %s207
      %s222 = sphi 0, %s208
      %s226 = sphi 0, %s226
      %s228 = sphi 0, %s226
      %s229 = sphi 0, %s228
      %s243 = sphi 0, %s229
      %s247 = sphi 0, %s247
      %s249 = sphi 0, %s247
      %s250 = sphi 0, %s249
      %s264 = sphi 0, %s250
      %s268 = sphi 0, %s268
      %s270 = sphi 0, %s268
      %s271 = sphi 0, %s270
      %s285 = sphi 0, %s271
      %s291 = sphi 0, %s293
      %s294 = sphi 0, %s291
      %s295 = sphi 0, %s294
      %s311 = sphi 0, %s295
      %s317 = sphi 0, %s319
      %s320 = sphi 0, %s317
      %s321 = sphi 0, %s320
      %s337 = sphi 0, %s321
      %s343 = sphi 0, %s345
      %s346 = sphi 0, %s343
      %s347 = sphi 0, %s346
      %s363 = sphi 0, %s347
    $region4: #{tpu_custom_call.1} parent=1 // loop_header_branch
      %38 = sbr.rel (%p36) target = $region8
    $region5: #{tpu_custom_call.1} parent=1 // loop_body
      %s40 = ssub.s32 %s35, 1
      %s41 = ssub.s32 %s35, 2
      %s42 = sadd.s32 %s35, 1
      %s43 = ssub.s32 %s35, %s42
      %p44 = scmp.eq.s32.totalorder %s43, 0
      %s46 = sadd.s32 %s45, 1
      %s47 = scalar_select %p44, %s45, %s46
      %p50 = pneg %p44
      %p51 = scmp.eq.s32.totalorder %s35, 1
      %p52 = por %p50, %p51
      %p53 = scmp.ne.s32.totalorder %s45, %s48
      %p54 = scmp.eq.s32.totalorder %s35, 0
      %p55 = por %p53, %p54
      %p56 = scmp.ne.s32.totalorder %s45, %s48
      %p57 = scmp.eq.s32.totalorder %s40, 1
      %p58 = por %p56, %p57
      %p59 = scmp.ne.s32.totalorder %s48, %s49
      %p60 = scmp.eq.s32.totalorder %s40, 0
      %p61 = por %p59, %p60
      %p62 = scmp.ne.s32.totalorder %s48, %s49
      %p63 = scmp.eq.s32.totalorder %s41, 1
      %p64 = por %p62, %p63
      %p66 = scmp.ne.s32.totalorder %s49, %s65
      %p67 = scmp.eq.s32.totalorder %s41, 0
      %p68 = por %p66, %p67
      %s69 = ssub.s32 %s35, %s42
      %p70 = scmp.eq.s32.totalorder %s69, 0
      %s72 = sadd.s32 %s71, 1
      %s73 = scalar_select %p70, %s71, %s72
      %p76 = pneg %p70
      %p77 = scmp.eq.s32.totalorder %s35, 1
      %p78 = por %p76, %p77
      %p79 = scmp.ne.s32.totalorder %s71, %s74
      %p80 = scmp.eq.s32.totalorder %s35, 0
      %p81 = por %p79, %p80
      %p82 = scmp.ne.s32.totalorder %s71, %s74
      %p83 = scmp.eq.s32.totalorder %s40, 1
      %p84 = por %p82, %p83
      %p85 = scmp.ne.s32.totalorder %s74, %s75
      %p86 = scmp.eq.s32.totalorder %s40, 0
      %p87 = por %p85, %p86
      %p88 = scmp.ne.s32.totalorder %s74, %s75
      %p89 = scmp.eq.s32.totalorder %s41, 1
      %p90 = por %p88, %p89
      %p92 = scmp.ne.s32.totalorder %s75, %s91
      %p93 = scmp.eq.s32.totalorder %s41, 0
      %p94 = por %p92, %p93
      %s95 = ssub.s32 %s35, %s42
      %p96 = scmp.eq.s32.totalorder %s95, 0
      %s98 = sadd.s32 %s97, 1
      %s99 = scalar_select %p96, %s97, %s98
      %p102 = pneg %p96
      %p103 = scmp.eq.s32.totalorder %s35, 1
      %p104 = por %p102, %p103
      %p105 = scmp.ne.s32.totalorder %s97, %s100
      %p106 = scmp.eq.s32.totalorder %s35, 0
      %p107 = por %p105, %p106
      %p108 = scmp.ne.s32.totalorder %s97, %s100
      %p109 = scmp.eq.s32.totalorder %s40, 1
      %p110 = por %p108, %p109
      %p111 = scmp.ne.s32.totalorder %s100, %s101
      %p112 = scmp.eq.s32.totalorder %s40, 0
      %p113 = por %p111, %p112
      %p114 = scmp.ne.s32.totalorder %s100, %s101
      %p115 = scmp.eq.s32.totalorder %s41, 1
      %p116 = por %p114, %p115
      %p118 = scmp.ne.s32.totalorder %s101, %s117
      %p119 = scmp.eq.s32.totalorder %s41, 0
      %p120 = por %p118, %p119
      %s122 = sadd.s32 %s121, 1
      %p125 = scmp.eq.s32.totalorder %s35, 1
      %p126 = scmp.ne.s32.totalorder %s121, %s123
      %p127 = scmp.eq.s32.totalorder %s35, 0
      %p128 = por %p126, %p127
      %p129 = scmp.ne.s32.totalorder %s121, %s123
      %p130 = scmp.eq.s32.totalorder %s40, 1
      %p131 = por %p129, %p130
      %p132 = scmp.ne.s32.totalorder %s123, %s124
      %p133 = scmp.eq.s32.totalorder %s40, 0
      %p134 = por %p132, %p133
      %p135 = scmp.ne.s32.totalorder %s123, %s124
      %p136 = scmp.eq.s32.totalorder %s41, 1
      %p137 = por %p135, %p136
      %p139 = scmp.ne.s32.totalorder %s124, %s138
      %p140 = scmp.eq.s32.totalorder %s41, 0
      %p141 = por %p139, %p140
      %s143 = sadd.s32 %s142, 1
      %p146 = scmp.eq.s32.totalorder %s35, 1
      %p147 = scmp.ne.s32.totalorder %s142, %s144
      %p148 = scmp.eq.s32.totalorder %s35, 0
      %p149 = por %p147, %p148
      %p150 = scmp.ne.s32.totalorder %s142, %s144
      %p151 = scmp.eq.s32.totalorder %s40, 1
      %p152 = por %p150, %p151
      %p153 = scmp.ne.s32.totalorder %s144, %s145
      %p154 = scmp.eq.s32.totalorder %s40, 0
      %p155 = por %p153, %p154
      %p156 = scmp.ne.s32.totalorder %s144, %s145
      %p157 = scmp.eq.s32.totalorder %s41, 1
      %p158 = por %p156, %p157
      %p160 = scmp.ne.s32.totalorder %s145, %s159
      %p161 = scmp.eq.s32.totalorder %s41, 0
      %p162 = por %p160, %p161
      %s164 = sadd.s32 %s163, 1
      %p167 = scmp.eq.s32.totalorder %s35, 1
      %p168 = scmp.ne.s32.totalorder %s163, %s165
      %p169 = scmp.eq.s32.totalorder %s35, 0
      %p170 = por %p168, %p169
      %p171 = scmp.ne.s32.totalorder %s163, %s165
      %p172 = scmp.eq.s32.totalorder %s40, 1
      %p173 = por %p171, %p172
      %p174 = scmp.ne.s32.totalorder %s165, %s166
      %p175 = scmp.eq.s32.totalorder %s40, 0
      %p176 = por %p174, %p175
      %p177 = scmp.ne.s32.totalorder %s165, %s166
      %p178 = scmp.eq.s32.totalorder %s41, 1
      %p179 = por %p177, %p178
      %p181 = scmp.ne.s32.totalorder %s166, %s180
      %p182 = scmp.eq.s32.totalorder %s41, 0
      %p183 = por %p181, %p182
      %s185 = sadd.s32 %s184, 1
      %p188 = scmp.eq.s32.totalorder %s35, 1
      %p189 = scmp.ne.s32.totalorder %s184, %s186
      %p190 = scmp.eq.s32.totalorder %s35, 0
      %p191 = por %p189, %p190
      %p192 = scmp.ne.s32.totalorder %s184, %s186
      %p193 = scmp.eq.s32.totalorder %s40, 1
      %p194 = por %p192, %p193
      %p195 = scmp.ne.s32.totalorder %s186, %s187
      %p196 = scmp.eq.s32.totalorder %s40, 0
      %p197 = por %p195, %p196
      %p198 = scmp.ne.s32.totalorder %s186, %s187
      %p199 = scmp.eq.s32.totalorder %s41, 1
      %p200 = por %p198, %p199
      %p202 = scmp.ne.s32.totalorder %s187, %s201
      %p203 = scmp.eq.s32.totalorder %s41, 0
      %p204 = por %p202, %p203
      %s206 = sadd.s32 %s205, 1
      %p209 = scmp.eq.s32.totalorder %s35, 1
      %p210 = scmp.ne.s32.totalorder %s205, %s207
      %p211 = scmp.eq.s32.totalorder %s35, 0
      %p212 = por %p210, %p211
      %p213 = scmp.ne.s32.totalorder %s205, %s207
      %p214 = scmp.eq.s32.totalorder %s40, 1
      %p215 = por %p213, %p214
      %p216 = scmp.ne.s32.totalorder %s207, %s208
      %p217 = scmp.eq.s32.totalorder %s40, 0
      %p218 = por %p216, %p217
      %p219 = scmp.ne.s32.totalorder %s207, %s208
      %p220 = scmp.eq.s32.totalorder %s41, 1
      %p221 = por %p219, %p220
      %p223 = scmp.ne.s32.totalorder %s208, %s222
      %p224 = scmp.eq.s32.totalorder %s41, 0
      %p225 = por %p223, %p224
      %s227 = sadd.s32 %s226, 1
      %p230 = scmp.eq.s32.totalorder %s35, 1
      %p231 = scmp.ne.s32.totalorder %s226, %s228
      %p232 = scmp.eq.s32.totalorder %s35, 0
      %p233 = por %p231, %p232
      %p234 = scmp.ne.s32.totalorder %s226, %s228
      %p235 = scmp.eq.s32.totalorder %s40, 1
      %p236 = por %p234, %p235
      %p237 = scmp.ne.s32.totalorder %s228, %s229
      %p238 = scmp.eq.s32.totalorder %s40, 0
      %p239 = por %p237, %p238
      %p240 = scmp.ne.s32.totalorder %s228, %s229
      %p241 = scmp.eq.s32.totalorder %s41, 1
      %p242 = por %p240, %p241
      %p244 = scmp.ne.s32.totalorder %s229, %s243
      %p245 = scmp.eq.s32.totalorder %s41, 0
      %p246 = por %p244, %p245
      %s248 = sadd.s32 %s247, 1
      %p251 = scmp.eq.s32.totalorder %s35, 1
      %p252 = scmp.ne.s32.totalorder %s247, %s249
      %p253 = scmp.eq.s32.totalorder %s35, 0
      %p254 = por %p252, %p253
      %p255 = scmp.ne.s32.totalorder %s247, %s249
      %p256 = scmp.eq.s32.totalorder %s40, 1
      %p257 = por %p255, %p256
      %p258 = scmp.ne.s32.totalorder %s249, %s250
      %p259 = scmp.eq.s32.totalorder %s40, 0
      %p260 = por %p258, %p259
      %p261 = scmp.ne.s32.totalorder %s249, %s250
      %p262 = scmp.eq.s32.totalorder %s41, 1
      %p263 = por %p261, %p262
      %p265 = scmp.ne.s32.totalorder %s250, %s264
      %p266 = scmp.eq.s32.totalorder %s41, 0
      %p267 = por %p265, %p266
      %s269 = sadd.s32 %s268, 1
      %p272 = scmp.eq.s32.totalorder %s35, 1
      %p273 = scmp.ne.s32.totalorder %s268, %s270
      %p274 = scmp.eq.s32.totalorder %s35, 0
      %p275 = por %p273, %p274
      %p276 = scmp.ne.s32.totalorder %s268, %s270
      %p277 = scmp.eq.s32.totalorder %s40, 1
      %p278 = por %p276, %p277
      %p279 = scmp.ne.s32.totalorder %s270, %s271
      %p280 = scmp.eq.s32.totalorder %s40, 0
      %p281 = por %p279, %p280
      %p282 = scmp.ne.s32.totalorder %s270, %s271
      %p283 = scmp.eq.s32.totalorder %s41, 1
      %p284 = por %p282, %p283
      %p286 = scmp.ne.s32.totalorder %s271, %s285
      %p287 = scmp.eq.s32.totalorder %s41, 0
      %p288 = por %p286, %p287
      %s289 = ssub.s32 %s35, %s42
      %p290 = scmp.eq.s32.totalorder %s289, 0
      %s292 = sadd.s32 %s291, 1
      %s293 = scalar_select %p290, %s291, %s292
      %p296 = pneg %p290
      %p297 = scmp.eq.s32.totalorder %s35, 1
      %p298 = por %p296, %p297
      %p299 = scmp.ne.s32.totalorder %s291, %s294
      %p300 = scmp.eq.s32.totalorder %s35, 0
      %p301 = por %p299, %p300
      %p302 = scmp.ne.s32.totalorder %s291, %s294
      %p303 = scmp.eq.s32.totalorder %s40, 1
      %p304 = por %p302, %p303
      %p305 = scmp.ne.s32.totalorder %s294, %s295
      %p306 = scmp.eq.s32.totalorder %s40, 0
      %p307 = por %p305, %p306
      %p308 = scmp.ne.s32.totalorder %s294, %s295
      %p309 = scmp.eq.s32.totalorder %s41, 1
      %p310 = por %p308, %p309
      %p312 = scmp.ne.s32.totalorder %s295, %s311
      %p313 = scmp.eq.s32.totalorder %s41, 0
      %p314 = por %p312, %p313
      %s315 = ssub.s32 %s35, %s42
      %p316 = scmp.eq.s32.totalorder %s315, 0
      %s318 = sadd.s32 %s317, 1
      %s319 = scalar_select %p316, %s317, %s318
      %p322 = pneg %p316
      %p323 = scmp.eq.s32.totalorder %s35, 1
      %p324 = por %p322, %p323
      %p325 = scmp.ne.s32.totalorder %s317, %s320
      %p326 = scmp.eq.s32.totalorder %s35, 0
      %p327 = por %p325, %p326
      %p328 = scmp.ne.s32.totalorder %s317, %s320
      %p329 = scmp.eq.s32.totalorder %s40, 1
      %p330 = por %p328, %p329
      %p331 = scmp.ne.s32.totalorder %s320, %s321
      %p332 = scmp.eq.s32.totalorder %s40, 0
      %p333 = por %p331, %p332
      %p334 = scmp.ne.s32.totalorder %s320, %s321
      %p335 = scmp.eq.s32.totalorder %s41, 1
      %p336 = por %p334, %p335
      %p338 = scmp.ne.s32.totalorder %s321, %s337
      %p339 = scmp.eq.s32.totalorder %s41, 0
      %p340 = por %p338, %p339
      %s341 = ssub.s32 %s35, %s42
      %p342 = scmp.eq.s32.totalorder %s341, 0
      %s344 = sadd.s32 %s343, 1
      %s345 = scalar_select %p342, %s343, %s344
      %p348 = pneg %p342
      %p349 = scmp.eq.s32.totalorder %s35, 1
      %p350 = por %p348, %p349
      %p351 = scmp.ne.s32.totalorder %s343, %s346
      %p352 = scmp.eq.s32.totalorder %s35, 0
      %p353 = por %p351, %p352
      %p354 = scmp.ne.s32.totalorder %s343, %s346
      %p355 = scmp.eq.s32.totalorder %s40, 1
      %p356 = por %p354, %p355
      %p357 = scmp.ne.s32.totalorder %s346, %s347
      %p358 = scmp.eq.s32.totalorder %s40, 0
      %p359 = por %p357, %p358
      %p360 = scmp.ne.s32.totalorder %s346, %s347
      %p361 = scmp.eq.s32.totalorder %s41, 1
      %p362 = por %p360, %p361
      %p364 = scmp.ne.s32.totalorder %s347, %s363
      %p365 = scmp.eq.s32.totalorder %s41, 0
      %p366 = por %p364, %p365
      %p367 = scmp.le.s32.totalorder 1, %s35
      %p368 = scmp.lt.s32.totalorder %s35, 3
      %p369 = pnand %p367, %p368
      %p370 = pneg %p369
      // Predicated region
      $region9: #{tpu_custom_call.1} parent=5 // pred_check
        _
      $region10: #{tpu_custom_call.1} parent=5 // pred_check_branch
        %372 = sbr.rel (%p369) target = $region12
      $region11: #{tpu_custom_call.1} parent=5 // pred_region
        %s373 = ssub.s32 %s35, 1
        // Predicated region
        $region13: #{tpu_custom_call.1} parent=11 // pred_check
          %p374 = pneg %p134
        $region14: #{tpu_custom_call.1} parent=11 // pred_check_branch
          %376 = sbr.rel (%p374) target = $region16
        $region15: #{tpu_custom_call.1} parent=11 // pred_region
          _
        $region16: #{tpu_custom_call.1} parent=11 // pred_fallthru
          _
        // Predicated region
        $region17: #{tpu_custom_call.1} parent=11 // pred_check
          %p377 = pneg %p155
        $region18: #{tpu_custom_call.1} parent=11 // pred_check_branch
          %379 = sbr.rel (%p377) target = $region20
        $region19: #{tpu_custom_call.1} parent=11 // pred_region
          %381 = vsyncadd [#allocation6], 0
          %s382 = sshll.u32 %s4, 4
          %s383 = int_to_ptr.hbm [resolvable:$true] %s382
          %s384 = sshll.u32 [#allocation7], 4
          %s385 = int_to_ptr.vmem [resolvable:$true] %s384
          %390 = dma.hbm_to_vmem [thread:$0]  %s383, 1024, %s385, [#allocation6], 128, 128, 8
        $region20: #{tpu_custom_call.1} parent=11 // pred_fallthru
          _
        // Predicated region
        $region21: #{tpu_custom_call.1} parent=11 // pred_check
          %p391 = pneg %p176
        $region22: #{tpu_custom_call.1} parent=11 // pred_check_branch
          %393 = sbr.rel (%p391) target = $region24
        $region23: #{tpu_custom_call.1} parent=11 // pred_region
          %395 = vsyncadd [#allocation9], 0
          %s396 = sshll.u32 %s5, 4
          %s397 = int_to_ptr.hbm [resolvable:$true] %s396
          %s398 = sshll.u32 [#allocation8], 4
          %s399 = int_to_ptr.vmem [resolvable:$true] %s398
          %404 = dma.hbm_to_vmem [thread:$0]  %s397, 256, %s399, [#allocation9], 128, 128, 8
        $region24: #{tpu_custom_call.1} parent=11 // pred_fallthru
          _
        // Predicated region
        $region25: #{tpu_custom_call.1} parent=11 // pred_check
          %p405 = pneg %p197
        $region26: #{tpu_custom_call.1} parent=11 // pred_check_branch
          %407 = sbr.rel (%p405) target = $region28
        $region27: #{tpu_custom_call.1} parent=11 // pred_region
          %409 = vsyncadd [#allocation9], 0
          %s410 = sshll.u32 %s6, 4
          %s411 = int_to_ptr.hbm [resolvable:$true] %s410
          %s412 = sshll.u32 [#allocation10], 4
          %s413 = int_to_ptr.vmem [resolvable:$true] %s412
          %418 = dma.hbm_to_vmem [thread:$0]  %s411, 1024, %s413, [#allocation9], 128, 128, 8
        $region28: #{tpu_custom_call.1} parent=11 // pred_fallthru
          _
        // Predicated region
        $region29: #{tpu_custom_call.1} parent=11 // pred_check
          %p419 = pneg %p218
        $region30: #{tpu_custom_call.1} parent=11 // pred_check_branch
          %421 = sbr.rel (%p419) target = $region32
        $region31: #{tpu_custom_call.1} parent=11 // pred_region
          %423 = vsyncadd [#allocation12], 0
          %s424 = sshll.u32 %s7, 4
          %s425 = int_to_ptr.hbm [resolvable:$true] %s424
          %s426 = sshll.u32 [#allocation11], 4
          %s427 = int_to_ptr.vmem [resolvable:$true] %s426
          %432 = dma.hbm_to_vmem [thread:$0]  %s425, 256, %s427, [#allocation12], 128, 128, 8
        $region32: #{tpu_custom_call.1} parent=11 // pred_fallthru
          _
        // Predicated region
        $region33: #{tpu_custom_call.1} parent=11 // pred_check
          %p433 = pneg %p239
        $region34: #{tpu_custom_call.1} parent=11 // pred_check_branch
          %435 = sbr.rel (%p433) target = $region36
        $region35: #{tpu_custom_call.1} parent=11 // pred_region
          %437 = vsyncadd [#allocation12], 0
          %s438 = sshll.u32 %s8, 4
          %s439 = int_to_ptr.hbm [resolvable:$true] %s438
          %s440 = sshll.u32 [#allocation13], 4
          %s441 = int_to_ptr.vmem [resolvable:$true] %s440
          %446 = dma.hbm_to_vmem [thread:$0]  %s439, 512, %s441, [#allocation12], 128, 128, 8
        $region36: #{tpu_custom_call.1} parent=11 // pred_fallthru
          _
        // Predicated region
        $region37: #{tpu_custom_call.1} parent=11 // pred_check
          %p447 = pneg %p260
        $region38: #{tpu_custom_call.1} parent=11 // pred_check_branch
          %449 = sbr.rel (%p447) target = $region40
        $region39: #{tpu_custom_call.1} parent=11 // pred_region
          %451 = vsyncadd [#allocation15], 0
          %s452 = sshll.u32 %s9, 4
          %s453 = int_to_ptr.hbm [resolvable:$true] %s452
          %s454 = sshll.u32 [#allocation14], 4
          %s455 = int_to_ptr.vmem [resolvable:$true] %s454
          %460 = dma.hbm_to_vmem [thread:$0]  %s453, 512, %s455, [#allocation15], 128, 128, 8
        $region40: #{tpu_custom_call.1} parent=11 // pred_fallthru
          _
        // Predicated region
        $region41: #{tpu_custom_call.1} parent=11 // pred_check
          %p461 = pneg %p281
        $region42: #{tpu_custom_call.1} parent=11 // pred_check_branch
          %463 = sbr.rel (%p461) target = $region44
        $region43: #{tpu_custom_call.1} parent=11 // pred_region
          _
        $region44: #{tpu_custom_call.1} parent=11 // pred_fallthru
          _
      $region12: #{tpu_custom_call.1} parent=5 // pred_fallthru
        _
      %p464 = scmp.lt.s32.totalorder %s35, 2
      // Predicated region
      $region45: #{tpu_custom_call.1} parent=5 // pred_check
        %p465 = pneg %p464
      $region46: #{tpu_custom_call.1} parent=5 // pred_check_branch
        %467 = sbr.rel (%p465) target = $region48
      $region47: #{tpu_custom_call.1} parent=5 // pred_region
        // Predicated region
        $region49: #{tpu_custom_call.1} parent=47 // pred_check
          %p468 = pneg %p55
        $region50: #{tpu_custom_call.1} parent=47 // pred_check_branch
          %470 = sbr.rel (%p468) target = $region52
        $region51: #{tpu_custom_call.1} parent=47 // pred_region
          %s471 = sand.u32 %s45, 1
          %s472 = scalar_lea.sflag [#allocation3], %s471
          %s473 = sand.u32 %s45, 1
          %s474 = smul.addr %s473, 16
          %s475 = scalar_lea.vmem [#allocation2], %s474
          %477 = vsyncadd %s472, 0
          %s478 = smul.addr %s35, 2
          %s479 = smul.addr %s478, 8
          %s480 = scalar_lea.hbm %s0, %s479
          %s481 = sshll.u32 %s480, 4
          %s482 = int_to_ptr.hbm [resolvable:$true] %s481
          %s483 = sshll.u32 %s475, 4
          %s484 = int_to_ptr.vmem [resolvable:$true] %s483
          %489 = dma.hbm_to_vmem [thread:$0]  %s482, 256, %s484, %s472, 128, 128, 8
        $region52: #{tpu_custom_call.1} parent=47 // pred_fallthru
          _
        // Predicated region
        $region53: #{tpu_custom_call.1} parent=47 // pred_check
          %p490 = pneg %p81
        $region54: #{tpu_custom_call.1} parent=47 // pred_check_branch
          %492 = sbr.rel (%p490) target = $region56
        $region55: #{tpu_custom_call.1} parent=47 // pred_region
          %p493 = scmp.lt.s32.totalorder %s35, 1
          %s494 = scalar_select %p493, %s35, 1
          %s495 = smul.addr %s494, 2
          %s496 = smul.addr %s495, 8
          %s497 = scalar_lea.vmem %s1, %s496
        $region56: #{tpu_custom_call.1} parent=47 // pred_fallthru
          _
        // Predicated region
        $region57: #{tpu_custom_call.1} parent=47 // pred_check
          %p498 = pneg %p107
        $region58: #{tpu_custom_call.1} parent=47 // pred_check_branch
          %500 = sbr.rel (%p498) target = $region60
        $region59: #{tpu_custom_call.1} parent=47 // pred_region
          %s501 = sand.u32 %s35, 1
          %s502 = scalar_lea.sflag [#allocation6], %s501
          %s503 = sand.u32 %s97, 1
          %s504 = smul.addr %s503, 16
          %s505 = scalar_lea.vmem [#allocation5], %s504
          %507 = vsyncadd %s502, 0
          %s508 = smul.addr %s35, 2
          %s509 = smul.addr %s508, 8
          %s510 = scalar_lea.hbm %s2, %s509
          %s511 = sshll.u32 %s510, 4
          %s512 = int_to_ptr.hbm [resolvable:$true] %s511
          %s513 = sshll.u32 %s505, 4
          %s514 = int_to_ptr.vmem [resolvable:$true] %s513
          %519 = dma.hbm_to_vmem [thread:$0]  %s512, 256, %s514, %s502, 128, 128, 8
        $region60: #{tpu_custom_call.1} parent=47 // pred_fallthru
          _
      $region48: #{tpu_custom_call.1} parent=5 // pred_fallthru
        _
      %p520 = scmp.le.s32.totalorder 1, %s35
      %p521 = scmp.lt.s32.totalorder %s35, 3
      %p522 = pnand %p520, %p521
      %p523 = pneg %p522
      // Predicated region
      $region61: #{tpu_custom_call.1} parent=5 // pred_check
        _
      $region62: #{tpu_custom_call.1} parent=5 // pred_check_branch
        %525 = sbr.rel (%p522) target = $region64
      $region63: #{tpu_custom_call.1} parent=5 // pred_region
        %s526 = ssub.s32 %s35, 1
        %s527 = sand.u32 %s48, 1
        %s528 = scalar_lea.sflag [#allocation3], %s527
        %s529 = sand.u32 %s48, 1
        %s530 = smul.addr %s529, 16
        %s531 = scalar_lea.vmem [#allocation2], %s530
        // Predicated region
        $region65: #{tpu_custom_call.1} parent=63 // pred_check
          %p532 = pneg %p61
        $region66: #{tpu_custom_call.1} parent=63 // pred_check_branch
          %534 = sbr.rel (%p532) target = $region68
        $region67: #{tpu_custom_call.1} parent=63 // pred_region
          %536 = dma.done %s528, 256
        $region68: #{tpu_custom_call.1} parent=63 // pred_fallthru
          _
        %s537 = sand.u32 %s40, 1
        %s538 = scalar_lea.sflag [#allocation6], %s537
        %s539 = sand.u32 %s100, 1
        %s540 = smul.addr %s539, 16
        %s541 = scalar_lea.vmem [#allocation5], %s540
        // Predicated region
        $region69: #{tpu_custom_call.1} parent=63 // pred_check
          %p542 = pneg %p113
        $region70: #{tpu_custom_call.1} parent=63 // pred_check_branch
          %544 = sbr.rel (%p542) target = $region72
        $region71: #{tpu_custom_call.1} parent=63 // pred_region
          %546 = dma.done %s538, 256
        $region72: #{tpu_custom_call.1} parent=63 // pred_fallthru
          _
        // Predicated region
        $region73: #{tpu_custom_call.1} parent=63 // pred_check
          %p547 = pneg %p155
        $region74: #{tpu_custom_call.1} parent=63 // pred_check_branch
          %549 = sbr.rel (%p547) target = $region76
        $region75: #{tpu_custom_call.1} parent=63 // pred_region
          %551 = dma.done [#allocation6], 1024
        $region76: #{tpu_custom_call.1} parent=63 // pred_fallthru
          _
        // Predicated region
        $region77: #{tpu_custom_call.1} parent=63 // pred_check
          %p552 = pneg %p176
        $region78: #{tpu_custom_call.1} parent=63 // pred_check_branch
          %554 = sbr.rel (%p552) target = $region80
        $region79: #{tpu_custom_call.1} parent=63 // pred_region
          %556 = dma.done [#allocation9], 256
        $region80: #{tpu_custom_call.1} parent=63 // pred_fallthru
          _
        // Predicated region
        $region81: #{tpu_custom_call.1} parent=63 // pred_check
          %p557 = pneg %p197
        $region82: #{tpu_custom_call.1} parent=63 // pred_check_branch
          %559 = sbr.rel (%p557) target = $region84
        $region83: #{tpu_custom_call.1} parent=63 // pred_region
          %561 = dma.done [#allocation9], 1024
        $region84: #{tpu_custom_call.1} parent=63 // pred_fallthru
          _
        // Predicated region
        $region85: #{tpu_custom_call.1} parent=63 // pred_check
          %p562 = pneg %p218
        $region86: #{tpu_custom_call.1} parent=63 // pred_check_branch
          %564 = sbr.rel (%p562) target = $region88
        $region87: #{tpu_custom_call.1} parent=63 // pred_region
          %566 = dma.done [#allocation12], 256
        $region88: #{tpu_custom_call.1} parent=63 // pred_fallthru
          _
        // Predicated region
        $region89: #{tpu_custom_call.1} parent=63 // pred_check
          %p567 = pneg %p239
        $region90: #{tpu_custom_call.1} parent=63 // pred_check_branch
          %569 = sbr.rel (%p567) target = $region92
        $region91: #{tpu_custom_call.1} parent=63 // pred_region
          %571 = dma.done [#allocation12], 512
        $region92: #{tpu_custom_call.1} parent=63 // pred_fallthru
          _
        // Predicated region
        $region93: #{tpu_custom_call.1} parent=63 // pred_check
          %p572 = pneg %p260
        $region94: #{tpu_custom_call.1} parent=63 // pred_check_branch
          %574 = sbr.rel (%p572) target = $region96
        $region95: #{tpu_custom_call.1} parent=63 // pred_region
          %576 = dma.done [#allocation15], 512
        $region96: #{tpu_custom_call.1} parent=63 // pred_fallthru
          _
        %s577 = sand.u32 %s48, 1
        %s578 = scalar_lea.sflag [#allocation3], %s577
        %s579 = sand.u32 %s48, 1
        %s580 = smul.addr %s579, 16
        %s581 = scalar_lea.vmem [#allocation2], %s580
        %p582 = pneg %p61
        %p583 = pneg %p58
        %p584 = scmp.lt.s32.totalorder %s40, 1
        %s585 = scalar_select %p584, %s40, 1
        %s586 = smul.addr %s585, 2
        %s587 = smul.addr %s586, 8
        %s588 = scalar_lea.vmem %s1, %s587
        %p589 = pneg %p87
        %p590 = pneg %p84
        %s591 = sand.u32 %s40, 1
        %s592 = scalar_lea.sflag [#allocation6], %s591
        %s593 = sand.u32 %s100, 1
        %s594 = smul.addr %s593, 16
        %s595 = scalar_lea.vmem [#allocation5], %s594
        %p596 = pneg %p113
        %p597 = pneg %p110
        %p598 = pneg %p134
        %p599 = pneg %p131
        %p600 = pneg %p155
        %p601 = pneg %p152
        %p602 = pneg %p176
        %p603 = pneg %p173
        %p604 = pneg %p197
        %p605 = pneg %p194
        %p606 = pneg %p218
        %p607 = pneg %p215
        %p608 = pneg %p239
        %p609 = pneg %p236
        %p610 = pneg %p260
        %p611 = pneg %p257
        %p612 = pneg %p281
        %p613 = pneg %p278
        %p614 = pneg %p307
        %p615 = pneg %p304
        %s616 = sand.u32 %s294, 1
        %s617 = scalar_lea.sflag [#allocation4], %s616
        %s618 = sand.u32 %s294, 1
        %s619 = smul.addr %s618, 16
        %s620 = scalar_lea.vmem [#allocation16], %s619
        %p621 = pneg %p333
        %p622 = pneg %p330
        %s623 = sand.u32 %s40, 1
        %s624 = scalar_lea.sflag [#allocation18], %s623
        %s625 = sand.u32 %s320, 1
        %s626 = smul.addr %s625, 16
        %s627 = scalar_lea.vmem [#allocation17], %s626
        %p628 = pneg %p359
        %p629 = pneg %p356
        %s630 = sand.u32 %s40, 1
        %s631 = scalar_lea.sflag [#allocation18], %s630
        %s632 = sand.u32 %s346, 1
        %s633 = smul.addr %s632, 16
        %s634 = scalar_lea.vmem [#allocation19], %s633
        %p635 = scmp.lt.s32.totalorder %s40, 1
        %s636 = scalar_select %p635, %s40, 1
        %s637 = smul.addr %s636, 2
        %s638 = smul.addr %s637, 8
        %s639 = scalar_lea.vmem %s1, %s638
        %v640 = vld [vmem:[%s531] sm:$0xff]
        %v641 = vld [vmem:[%s531 + $0x8] sm:$0xff]
        %v642 = vld [vmem:[%s639] sm:$0xff]
        %v643 = vld [vmem:[%s639 + $0x8] sm:$0xff]
        %v644 = vld [vmem:[%s541] sm:$0xff]
        %v645 = vld [vmem:[%s541 + $0x8] sm:$0xff]
        %v646 = vld [vmem:[%s3] sm:$0xff]
        %v647 = vld [vmem:[%s3 + $0x8] sm:$0xff]
        %v648 = vld [vmem:[%s3 + $0x10] sm:$0xff]
        %v649 = vld [vmem:[%s3 + $0x18] sm:$0xff]
        %v650 = vld [vmem:[%s3 + $0x20] sm:$0x1]
        %vm651 = vcmask 269312
        %v653 = vsel %vm651, %v644, 0
        %v656 = vsel %vm651, %v645, 0
        %vm658 = vcmask 1040384
        %v660 = vsel %vm658, %v650, 0
        %662 = vmatpush.msra.mxu0 0.0
        %663 = vmatpush.msra.mxu0 0.0
        %664 = vmatpush.msra.mxu0 0.0
        %665 = vmatpush.msra.mxu0 0.0
        %666 = vmatpush.msra.mxu0 0.0
        %667 = vmatpush.msra.mxu0 0.0
        %668 = vmatpush.msra.mxu0 0.0
        %669 = vmatpush.msra.mxu0 0.0
        %670 = vmatpush.msra.mxu0 0.0
        %671 = vmatpush.msra.mxu0 0.0
        %672 = vmatpush.msra.mxu0 0.0
        %673 = vmatpush.msra.mxu0 %v660
        %674 = vmatpush.msra.mxu0 %v649
        %675 = vmatpush.msra.mxu0 %v648
        %676 = vmatpush.msra.mxu0 %v647
        %677 = vmatpush.msra.mxu0 %v646
        %678 = vmatmul.f32.gmra.mxu0 %v653
        %v679 = vpop.f32.mrf.mxu0
        %v680 = vadd.f32 0.0, %v679
        %681 = vmatmul.f32.gmra.mxu0 %v656
        %v682 = vpop.f32.mrf.mxu0
        %v683 = vadd.f32 0.0, %v682
        %684 = vdwg.mxu0
        %v685 = vmax.f32 %v680, 0.0
        %v686 = vmax.f32 %v683, 0.0
        %v687 = vld [vmem:[#allocation7] sm:$0xff]
        %v688 = vld [vmem:[#allocation7 + $0x8] sm:$0xff]
        %v689 = vld [vmem:[#allocation7 + $0x10] sm:$0xff]
        %v690 = vld [vmem:[#allocation7 + $0x18] sm:$0xff]
        %v691 = vld [vmem:[#allocation8] sm:$0xff]
        %vm692 = vcmask 64512
        %v694 = vsel %vm692, %v642, 0
        %v697 = vsel %vm692, %v643, 0
        %699 = vmatpush.msra.mxu0 0.0
        %700 = vmatpush.msra.mxu0 0.0
        %701 = vmatpush.msra.mxu0 0.0
        %702 = vmatpush.msra.mxu0 0.0
        %703 = vmatpush.msra.mxu0 0.0
        %704 = vmatpush.msra.mxu0 0.0
        %705 = vmatpush.msra.mxu0 0.0
        %706 = vmatpush.msra.mxu0 0.0
        %707 = vmatpush.msra.mxu0 0.0
        %708 = vmatpush.msra.mxu0 0.0
        %709 = vmatpush.msra.mxu0 0.0
        %710 = vmatpush.msra.mxu0 0.0
        %711 = vmatpush.msra.mxu0 0.0
        %712 = vmatpush.msra.mxu0 0.0
        %713 = vmatpush.msra.mxu0 0.0
        %714 = vmatpush.msra.mxu0 %v691
        %715 = vmatmul.f32.gmra.mxu0 %v694
        %v716 = vpop.f32.mrf.mxu0
        %v717 = vadd.f32 0.0, %v716
        %718 = vmatmul.f32.gmra.mxu0 %v697
        %v719 = vpop.f32.mrf.mxu0
        %v720 = vadd.f32 0.0, %v719
        %721 = vdwg.mxu0
        %vm722 = vcmask 261120
        %v724 = vsel %vm722, %v685, 0
        %v727 = vsel %vm722, %v686, 0
        %729 = vmatpush.msra.mxu0 0.0
        %730 = vmatpush.msra.mxu0 0.0
        %731 = vmatpush.msra.mxu0 0.0
        %732 = vmatpush.msra.mxu0 0.0
        %733 = vmatpush.msra.mxu0 0.0
        %734 = vmatpush.msra.mxu0 0.0
        %735 = vmatpush.msra.mxu0 0.0
        %736 = vmatpush.msra.mxu0 0.0
        %737 = vmatpush.msra.mxu0 0.0
        %738 = vmatpush.msra.mxu0 0.0
        %739 = vmatpush.msra.mxu0 0.0
        %740 = vmatpush.msra.mxu0 0.0
        %741 = vmatpush.msra.mxu0 %v690
        %742 = vmatpush.msra.mxu0 %v689
        %743 = vmatpush.msra.mxu0 %v688
        %744 = vmatpush.msra.mxu0 %v687
        %745 = vmatmul.f32.gmra.mxu0 %v724
        %v746 = vpop.f32.mrf.mxu0
        %v747 = vadd.f32 %v717, %v746
        %748 = vmatmul.f32.gmra.mxu0 %v727
        %v749 = vpop.f32.mrf.mxu0
        %v750 = vadd.f32 %v720, %v749
        %751 = vdwg.mxu0
        %v752 = vld [vmem:[#allocation10] sm:$0xff]
        %v753 = vld [vmem:[#allocation10 + $0x8] sm:$0xff]
        %v754 = vld [vmem:[#allocation10 + $0x10] sm:$0xff]
        %v755 = vld [vmem:[#allocation10 + $0x18] sm:$0xff]
        %v756 = vld [vmem:[#allocation11] sm:$0xff]
        %757 = vmatpush.msra.mxu0 0.0
        %758 = vmatpush.msra.mxu0 0.0
        %759 = vmatpush.msra.mxu0 0.0
        %760 = vmatpush.msra.mxu0 0.0
        %761 = vmatpush.msra.mxu0 0.0
        %762 = vmatpush.msra.mxu0 0.0
        %763 = vmatpush.msra.mxu0 0.0
        %764 = vmatpush.msra.mxu0 0.0
        %765 = vmatpush.msra.mxu0 0.0
        %766 = vmatpush.msra.mxu0 0.0
        %767 = vmatpush.msra.mxu0 0.0
        %768 = vmatpush.msra.mxu0 0.0
        %769 = vmatpush.msra.mxu0 0.0
        %770 = vmatpush.msra.mxu0 0.0
        %771 = vmatpush.msra.mxu0 0.0
        %772 = vmatpush.msra.mxu0 %v756
        %773 = vmatmul.f32.gmra.mxu0 %v694
        %v774 = vpop.f32.mrf.mxu0
        %v775 = vadd.f32 0.0, %v774
        %776 = vmatmul.f32.gmra.mxu0 %v697
        %v777 = vpop.f32.mrf.mxu0
        %v778 = vadd.f32 0.0, %v777
        %779 = vdwg.mxu0
        %780 = vrot.lane.b32.xlu0 %v685, 96
        %v781 = vpop.permute.xlu0 %780
        %782 = vrot.lane.b32.xlu0 %v686, 96
        %v783 = vpop.permute.xlu0 %782
        %v784 = vsel %vm722, %v781, 0
        %v786 = vsel %vm722, %v783, 0
        %788 = vmatpush.msra.mxu0 0.0
        %789 = vmatpush.msra.mxu0 0.0
        %790 = vmatpush.msra.mxu0 0.0
        %791 = vmatpush.msra.mxu0 0.0
        %792 = vmatpush.msra.mxu0 0.0
        %793 = vmatpush.msra.mxu0 0.0
        %794 = vmatpush.msra.mxu0 0.0
        %795 = vmatpush.msra.mxu0 0.0
        %796 = vmatpush.msra.mxu0 0.0
        %797 = vmatpush.msra.mxu0 0.0
        %798 = vmatpush.msra.mxu0 0.0
        %799 = vmatpush.msra.mxu0 0.0
        %800 = vmatpush.msra.mxu0 %v755
        %801 = vmatpush.msra.mxu0 %v754
        %802 = vmatpush.msra.mxu0 %v753
        %803 = vmatpush.msra.mxu0 %v752
        %804 = vmatmul.f32.gmra.mxu0 %v784
        %v805 = vpop.f32.mrf.mxu0
        %v806 = vadd.f32 %v775, %v805
        %807 = vmatmul.f32.gmra.mxu0 %v786
        %v808 = vpop.f32.mrf.mxu0
        %v809 = vadd.f32 %v778, %v808
        %810 = vdwg.mxu0
        %813 = vrot.lane.b32.xlu0 %v747, 96
        %v814 = vpop.permute.xlu0 %813
        %815 = vrot.lane.b32.xlu0 %v750, 96
        %v816 = vpop.permute.xlu0 %815
        %vm819 = vcmask 130048
        %v821 = vsel %vm819, %v640, 0
        %v824 = vsel %vm819, %v641, 0
        %826 = vmatpush.msra.mxu0 0.0
        %827 = vmatpush.msra.mxu0 0.0
        %828 = vmatpush.msra.mxu0 0.0
        %829 = vmatpush.msra.mxu0 0.0
        %830 = vmatpush.msra.mxu0 0.0
        %831 = vmatpush.msra.mxu0 0.0
        %832 = vmatpush.msra.mxu0 0.0
        %833 = vmatpush.msra.mxu0 0.0
        %834 = vmatpush.msra.mxu0 0.0
        %835 = vmatpush.msra.mxu0 0.0
        %836 = vmatpush.msra.mxu0 0.0
        %837 = vmatpush.msra.mxu0 0.0
        %838 = vmatpush.msra.mxu0 0.0
        %839 = vmatpush.msra.mxu0 0.0
        %840 = vmatpush.msra.mxu0 %v816
        %841 = vmatpush.msra.mxu0 %v814
        %842 = vmatmul.f32.gmra.mxu0 %v821
        %v843 = vpop.f32.mrf.mxu0
        %v844 = vadd.f32 0.0, %v843
        %845 = vmatmul.f32.gmra.mxu0 %v824
        %v846 = vpop.f32.mrf.mxu0
        %v847 = vadd.f32 0.0, %v846
        %848 = vdwg.mxu0
        %v849 = vadd.f32 %v747, %v844
        %v850 = vadd.f32 %v750, %v847
        %v851 = vmax.f32 %v849, 0.0
        %v852 = vmax.f32 %v850, 0.0
        %855 = vrot.lane.b32.xlu0 %v806, 96
        %v856 = vpop.permute.xlu0 %855
        %857 = vrot.lane.b32.xlu0 %v809, 96
        %v858 = vpop.permute.xlu0 %857
        %861 = vmatpush.msra.mxu0 0.0
        %862 = vmatpush.msra.mxu0 0.0
        %863 = vmatpush.msra.mxu0 0.0
        %864 = vmatpush.msra.mxu0 0.0
        %865 = vmatpush.msra.mxu0 0.0
        %866 = vmatpush.msra.mxu0 0.0
        %867 = vmatpush.msra.mxu0 0.0
        %868 = vmatpush.msra.mxu0 0.0
        %869 = vmatpush.msra.mxu0 0.0
        %870 = vmatpush.msra.mxu0 0.0
        %871 = vmatpush.msra.mxu0 0.0
        %872 = vmatpush.msra.mxu0 0.0
        %873 = vmatpush.msra.mxu0 0.0
        %874 = vmatpush.msra.mxu0 0.0
        %875 = vmatpush.msra.mxu0 %v858
        %876 = vmatpush.msra.mxu0 %v856
        %877 = vmatmul.f32.gmra.mxu0 %v821
        %v878 = vpop.f32.mrf.mxu0
        %v879 = vadd.f32 0.0, %v878
        %880 = vmatmul.f32.gmra.mxu0 %v824
        %v881 = vpop.f32.mrf.mxu0
        %v882 = vadd.f32 0.0, %v881
        %883 = vdwg.mxu0
        %v884 = vadd.f32 %v806, %v879
        %v885 = vadd.f32 %v809, %v882
        %v886 = vmax.f32 %v884, 0.0
        %v887 = vmax.f32 %v885, 0.0
        %s888 = scalar_lea.vmem [#allocation7], 32
        %v889 = vld [vmem:[%s888] sm:$0xff]
        %v890 = vld [vmem:[%s888 + $0x8] sm:$0xff]
        %v891 = vld [vmem:[%s888 + $0x10] sm:$0xff]
        %v892 = vld [vmem:[%s888 + $0x18] sm:$0xff]
        %s893 = scalar_lea.vmem [#allocation8], 8
        %v894 = vld [vmem:[%s893] sm:$0xff]
        %895 = vmatpush.msra.mxu0 0.0
        %896 = vmatpush.msra.mxu0 0.0
        %897 = vmatpush.msra.mxu0 0.0
        %898 = vmatpush.msra.mxu0 0.0
        %899 = vmatpush.msra.mxu0 0.0
        %900 = vmatpush.msra.mxu0 0.0
        %901 = vmatpush.msra.mxu0 0.0
        %902 = vmatpush.msra.mxu0 0.0
        %903 = vmatpush.msra.mxu0 0.0
        %904 = vmatpush.msra.mxu0 0.0
        %905 = vmatpush.msra.mxu0 0.0
        %906 = vmatpush.msra.mxu0 0.0
        %907 = vmatpush.msra.mxu0 0.0
        %908 = vmatpush.msra.mxu0 0.0
        %909 = vmatpush.msra.mxu0 0.0
        %910 = vmatpush.msra.mxu0 %v894
        %911 = vmatmul.f32.gmra.mxu0 %v694
        %v912 = vpop.f32.mrf.mxu0
        %v913 = vadd.f32 0.0, %v912
        %914 = vmatmul.f32.gmra.mxu0 %v697
        %v915 = vpop.f32.mrf.mxu0
        %v916 = vadd.f32 0.0, %v915
        %917 = vdwg.mxu0
        %v919 = vsel %vm722, %v851, 0
        %v922 = vsel %vm722, %v852, 0
        %924 = vmatpush.msra.mxu0 0.0
        %925 = vmatpush.msra.mxu0 0.0
        %926 = vmatpush.msra.mxu0 0.0
        %927 = vmatpush.msra.mxu0 0.0
        %928 = vmatpush.msra.mxu0 0.0
        %929 = vmatpush.msra.mxu0 0.0
        %930 = vmatpush.msra.mxu0 0.0
        %931 = vmatpush.msra.mxu0 0.0
        %932 = vmatpush.msra.mxu0 0.0
        %933 = vmatpush.msra.mxu0 0.0
        %934 = vmatpush.msra.mxu0 0.0
        %935 = vmatpush.msra.mxu0 0.0
        %936 = vmatpush.msra.mxu0 %v892
        %937 = vmatpush.msra.mxu0 %v891
        %938 = vmatpush.msra.mxu0 %v890
        %939 = vmatpush.msra.mxu0 %v889
        %940 = vmatmul.f32.gmra.mxu0 %v919
        %v941 = vpop.f32.mrf.mxu0
        %v942 = vadd.f32 %v913, %v941
        %943 = vmatmul.f32.gmra.mxu0 %v922
        %v944 = vpop.f32.mrf.mxu0
        %v945 = vadd.f32 %v916, %v944
        %946 = vdwg.mxu0
        %s947 = scalar_lea.vmem [#allocation10], 32
        %v948 = vld [vmem:[%s947] sm:$0xff]
        %v949 = vld [vmem:[%s947 + $0x8] sm:$0xff]
        %v950 = vld [vmem:[%s947 + $0x10] sm:$0xff]
        %v951 = vld [vmem:[%s947 + $0x18] sm:$0xff]
        %s952 = scalar_lea.vmem [#allocation11], 8
        %v953 = vld [vmem:[%s952] sm:$0xff]
        %954 = vmatpush.msra.mxu0 0.0
        %955 = vmatpush.msra.mxu0 0.0
        %956 = vmatpush.msra.mxu0 0.0
        %957 = vmatpush.msra.mxu0 0.0
        %958 = vmatpush.msra.mxu0 0.0
        %959 = vmatpush.msra.mxu0 0.0
        %960 = vmatpush.msra.mxu0 0.0
        %961 = vmatpush.msra.mxu0 0.0
        %962 = vmatpush.msra.mxu0 0.0
        %963 = vmatpush.msra.mxu0 0.0
        %964 = vmatpush.msra.mxu0 0.0
        %965 = vmatpush.msra.mxu0 0.0
        %966 = vmatpush.msra.mxu0 0.0
        %967 = vmatpush.msra.mxu0 0.0
        %968 = vmatpush.msra.mxu0 0.0
        %969 = vmatpush.msra.mxu0 %v953
        %970 = vmatmul.f32.gmra.mxu0 %v694
        %v971 = vpop.f32.mrf.mxu0
        %v972 = vadd.f32 0.0, %v971
        %973 = vmatmul.f32.gmra.mxu0 %v697
        %v974 = vpop.f32.mrf.mxu0
        %v975 = vadd.f32 0.0, %v974
        %976 = vdwg.mxu0
        %v978 = vsel %vm722, %v886, 0
        %v981 = vsel %vm722, %v887, 0
        %983 = vmatpush.msra.mxu0 0.0
        %984 = vmatpush.msra.mxu0 0.0
        %985 = vmatpush.msra.mxu0 0.0
        %986 = vmatpush.msra.mxu0 0.0
        %987 = vmatpush.msra.mxu0 0.0
        %988 = vmatpush.msra.mxu0 0.0
        %989 = vmatpush.msra.mxu0 0.0
        %990 = vmatpush.msra.mxu0 0.0
        %991 = vmatpush.msra.mxu0 0.0
        %992 = vmatpush.msra.mxu0 0.0
        %993 = vmatpush.msra.mxu0 0.0
        %994 = vmatpush.msra.mxu0 0.0
        %995 = vmatpush.msra.mxu0 %v951
        %996 = vmatpush.msra.mxu0 %v950
        %997 = vmatpush.msra.mxu0 %v949
        %998 = vmatpush.msra.mxu0 %v948
        %999 = vmatmul.f32.gmra.mxu0 %v978
        %v1000 = vpop.f32.mrf.mxu0
        %v1001 = vadd.f32 %v972, %v1000
        %1002 = vmatmul.f32.gmra.mxu0 %v981
        %v1003 = vpop.f32.mrf.mxu0
        %v1004 = vadd.f32 %v975, %v1003
        %1005 = vdwg.mxu0
        %1008 = vrot.lane.b32.xlu0 %v942, 96
        %v1009 = vpop.permute.xlu0 %1008
        %1010 = vrot.lane.b32.xlu0 %v945, 96
        %v1011 = vpop.permute.xlu0 %1010
        %1014 = vmatpush.msra.mxu0 0.0
        %1015 = vmatpush.msra.mxu0 0.0
        %1016 = vmatpush.msra.mxu0 0.0
        %1017 = vmatpush.msra.mxu0 0.0
        %1018 = vmatpush.msra.mxu0 0.0
        %1019 = vmatpush.msra.mxu0 0.0
        %1020 = vmatpush.msra.mxu0 0.0
        %1021 = vmatpush.msra.mxu0 0.0
        %1022 = vmatpush.msra.mxu0 0.0
        %1023 = vmatpush.msra.mxu0 0.0
        %1024 = vmatpush.msra.mxu0 0.0
        %1025 = vmatpush.msra.mxu0 0.0
        %1026 = vmatpush.msra.mxu0 0.0
        %1027 = vmatpush.msra.mxu0 0.0
        %1028 = vmatpush.msra.mxu0 %v1011
        %1029 = vmatpush.msra.mxu0 %v1009
        %1030 = vmatmul.f32.gmra.mxu0 %v821
        %v1031 = vpop.f32.mrf.mxu0
        %v1032 = vadd.f32 0.0, %v1031
        %1033 = vmatmul.f32.gmra.mxu0 %v824
        %v1034 = vpop.f32.mrf.mxu0
        %v1035 = vadd.f32 0.0, %v1034
        %1036 = vdwg.mxu0
        %v1037 = vadd.f32 %v942, %v1032
        %v1038 = vadd.f32 %v945, %v1035
        %v1039 = vmax.f32 %v1037, 0.0
        %v1040 = vmax.f32 %v1038, 0.0
        %1043 = vrot.lane.b32.xlu0 %v1001, 96
        %v1044 = vpop.permute.xlu0 %1043
        %1045 = vrot.lane.b32.xlu0 %v1004, 96
        %v1046 = vpop.permute.xlu0 %1045
        %1049 = vmatpush.msra.mxu0 0.0
        %1050 = vmatpush.msra.mxu0 0.0
        %1051 = vmatpush.msra.mxu0 0.0
        %1052 = vmatpush.msra.mxu0 0.0
        %1053 = vmatpush.msra.mxu0 0.0
        %1054 = vmatpush.msra.mxu0 0.0
        %1055 = vmatpush.msra.mxu0 0.0
        %1056 = vmatpush.msra.mxu0 0.0
        %1057 = vmatpush.msra.mxu0 0.0
        %1058 = vmatpush.msra.mxu0 0.0
        %1059 = vmatpush.msra.mxu0 0.0
        %1060 = vmatpush.msra.mxu0 0.0
        %1061 = vmatpush.msra.mxu0 0.0
        %1062 = vmatpush.msra.mxu0 0.0
        %1063 = vmatpush.msra.mxu0 %v1046
        %1064 = vmatpush.msra.mxu0 %v1044
        %1065 = vmatmul.f32.gmra.mxu0 %v821
        %v1066 = vpop.f32.mrf.mxu0
        %v1067 = vadd.f32 0.0, %v1066
        %1068 = vmatmul.f32.gmra.mxu0 %v824
        %v1069 = vpop.f32.mrf.mxu0
        %v1070 = vadd.f32 0.0, %v1069
        %1071 = vdwg.mxu0
        %v1072 = vadd.f32 %v1001, %v1067
        %v1073 = vadd.f32 %v1004, %v1070
        %v1074 = vmax.f32 %v1072, 0.0
        %v1075 = vmax.f32 %v1073, 0.0
        %v1076 = vld [vmem:[#allocation13] sm:$0xff]
        %v1077 = vld [vmem:[#allocation13 + $0x8] sm:$0xff]
        %v1078 = vld [vmem:[#allocation13 + $0x10] sm:$0xff]
        %v1079 = vld [vmem:[#allocation13 + $0x18] sm:$0xff]
        %v1080 = vld [vmem:[#allocation14] sm:$0xff]
        %v1081 = vld [vmem:[#allocation14 + $0x8] sm:$0xff]
        %v1082 = vld [vmem:[#allocation14 + $0x10] sm:$0xff]
        %v1083 = vld [vmem:[#allocation14 + $0x18] sm:$0xff]
        %v1085 = vsel %vm722, %v1074, 0
        %v1088 = vsel %vm722, %v1075, 0
        %1090 = vmatpush.msra.mxu0 0.0
        %1091 = vmatpush.msra.mxu0 0.0
        %1092 = vmatpush.msra.mxu0 0.0
        %1093 = vmatpush.msra.mxu0 0.0
        %1094 = vmatpush.msra.mxu0 0.0
        %1095 = vmatpush.msra.mxu0 0.0
        %1096 = vmatpush.msra.mxu0 0.0
        %1097 = vmatpush.msra.mxu0 0.0
        %1098 = vmatpush.msra.mxu0 0.0
        %1099 = vmatpush.msra.mxu0 0.0
        %1100 = vmatpush.msra.mxu0 0.0
        %1101 = vmatpush.msra.mxu0 0.0
        %1102 = vmatpush.msra.mxu0 %v1083
        %1103 = vmatpush.msra.mxu0 %v1082
        %1104 = vmatpush.msra.mxu0 %v1081
        %1105 = vmatpush.msra.mxu0 %v1080
        %1106 = vmatmul.f32.gmra.mxu0 %v1085
        %v1107 = vpop.f32.mrf.mxu0
        %v1108 = vadd.f32 0.0, %v1107
        %1109 = vmatmul.f32.gmra.mxu0 %v1088
        %v1110 = vpop.f32.mrf.mxu0
        %v1111 = vadd.f32 0.0, %v1110
        %1112 = vdwg.mxu0
        %v1114 = vsel %vm722, %v1039, 0
        %v1117 = vsel %vm722, %v1040, 0
        %1119 = vmatpush.msra.mxu0 0.0
        %1120 = vmatpush.msra.mxu0 0.0
        %1121 = vmatpush.msra.mxu0 0.0
        %1122 = vmatpush.msra.mxu0 0.0
        %1123 = vmatpush.msra.mxu0 0.0
        %1124 = vmatpush.msra.mxu0 0.0
        %1125 = vmatpush.msra.mxu0 0.0
        %1126 = vmatpush.msra.mxu0 0.0
        %1127 = vmatpush.msra.mxu0 0.0
        %1128 = vmatpush.msra.mxu0 0.0
        %1129 = vmatpush.msra.mxu0 0.0
        %1130 = vmatpush.msra.mxu0 0.0
        %1131 = vmatpush.msra.mxu0 %v1079
        %1132 = vmatpush.msra.mxu0 %v1078
        %1133 = vmatpush.msra.mxu0 %v1077
        %1134 = vmatpush.msra.mxu0 %v1076
        %1135 = vmatmul.f32.gmra.mxu0 %v1114
        %v1136 = vpop.f32.mrf.mxu0
        %v1137 = vadd.f32 %v1108, %v1136
        %1138 = vmatmul.f32.gmra.mxu0 %v1117
        %v1139 = vpop.f32.mrf.mxu0
        %v1140 = vadd.f32 %v1111, %v1139
        %1141 = vdwg.mxu0
        %v1142 = vld [vmem:[%s10] sm:$0xff]
        %1143 = vmatpush.msra.mxu0 0.0
        %1144 = vmatpush.msra.mxu0 0.0
        %1145 = vmatpush.msra.mxu0 0.0
        %1146 = vmatpush.msra.mxu0 0.0
        %1147 = vmatpush.msra.mxu0 0.0
        %1148 = vmatpush.msra.mxu0 0.0
        %1149 = vmatpush.msra.mxu0 0.0
        %1150 = vmatpush.msra.mxu0 0.0
        %1151 = vmatpush.msra.mxu0 0.0
        %1152 = vmatpush.msra.mxu0 0.0
        %1153 = vmatpush.msra.mxu0 0.0
        %1154 = vmatpush.msra.mxu0 0.0
        %1155 = vmatpush.msra.mxu0 0.0
        %1156 = vmatpush.msra.mxu0 0.0
        %1157 = vmatpush.msra.mxu0 0.0
        %1158 = vmatpush.msra.mxu0 %v1142
        %1159 = vmatmul.f32.gmra.mxu0 %v694
        %v1160 = vpop.f32.mrf.mxu0
        %v1161 = vadd.f32 0.0, %v1160
        %1162 = vmatmul.f32.gmra.mxu0 %v697
        %v1163 = vpop.f32.mrf.mxu0
        %v1164 = vadd.f32 0.0, %v1163
        %1165 = vdwg.mxu0
        %v1166 = vadd.f32 %v1137, %v1161
        %v1167 = vadd.f32 %v1140, %v1164
        %1168 = vst [vmem:[%s620] sm:$0xff] %v1166
        %1169 = vst [vmem:[%s620 + $0x8] sm:$0xff] %v1167
        %1170 = vst.msk [vmem:[%s627] sm:$0xff] %vm722, %v1039
        %1171 = vst.msk [vmem:[%s627 + $0x8] sm:$0xff] %vm722, %v1040
        %1172 = vst.msk [vmem:[%s634] sm:$0xff] %vm722, %v1074
        %1173 = vst.msk [vmem:[%s634 + $0x8] sm:$0xff] %vm722, %v1075
        %s1174 = sand.u32 %s294, 1
        %s1175 = scalar_lea.sflag [#allocation4], %s1174
        %s1176 = sand.u32 %s294, 1
        %s1177 = smul.addr %s1176, 16
        %s1178 = scalar_lea.vmem [#allocation16], %s1177
        %s1179 = sand.u32 %s40, 1
        %s1180 = scalar_lea.sflag [#allocation18], %s1179
        %s1181 = sand.u32 %s320, 1
        %s1182 = smul.addr %s1181, 16
        %s1183 = scalar_lea.vmem [#allocation17], %s1182
        %s1184 = sand.u32 %s40, 1
        %s1185 = scalar_lea.sflag [#allocation18], %s1184
        %s1186 = sand.u32 %s346, 1
        %s1187 = smul.addr %s1186, 16
        %s1188 = scalar_lea.vmem [#allocation19], %s1187
        // Predicated region
        $region97: #{tpu_custom_call.1} parent=63 // pred_check
          %p1189 = pneg %p304
        $region98: #{tpu_custom_call.1} parent=63 // pred_check_branch
          %1191 = sbr.rel (%p1189) target = $region100
        $region99: #{tpu_custom_call.1} parent=63 // pred_region
          %1193 = vsyncadd %s1175, 0
          %s1194 = smul.addr %s40, 2
          %s1195 = smul.addr %s1194, 8
          %s1196 = scalar_lea.hbm %s11, %s1195
          %s1197 = sshll.u32 %s1178, 4
          %s1198 = int_to_ptr.vmem [resolvable:$true] %s1197
          %s1199 = sshll.u32 %s1196, 4
          %s1200 = int_to_ptr.hbm [resolvable:$true] %s1199
          %1205 = dma.vmem_to_hbm [thread:$0]  %s1198, 256, %s1200, %s1175, 128, 128, 8
        $region100: #{tpu_custom_call.1} parent=63 // pred_fallthru
          _
        // Predicated region
        $region101: #{tpu_custom_call.1} parent=63 // pred_check
          %p1206 = pneg %p330
        $region102: #{tpu_custom_call.1} parent=63 // pred_check_branch
          %1208 = sbr.rel (%p1206) target = $region104
        $region103: #{tpu_custom_call.1} parent=63 // pred_region
          %1210 = vsyncadd %s1180, 0
          %s1211 = smul.addr %s40, 2
          %s1212 = smul.addr %s1211, 8
          %s1213 = scalar_lea.hbm %s12, %s1212
          %s1214 = sshll.u32 %s1183, 4
          %s1215 = int_to_ptr.vmem [resolvable:$true] %s1214
          %s1216 = sshll.u32 %s1213, 4
          %s1217 = int_to_ptr.hbm [resolvable:$true] %s1216
          %1222 = dma.vmem_to_hbm [thread:$0]  %s1215, 256, %s1217, %s1180, 128, 128, 8
        $region104: #{tpu_custom_call.1} parent=63 // pred_fallthru
          _
        // Predicated region
        $region105: #{tpu_custom_call.1} parent=63 // pred_check
          %p1223 = pneg %p356
        $region106: #{tpu_custom_call.1} parent=63 // pred_check_branch
          %1225 = sbr.rel (%p1223) target = $region108
        $region107: #{tpu_custom_call.1} parent=63 // pred_region
          %1227 = vsyncadd %s1185, 0
          %s1228 = smul.addr %s40, 2
          %s1229 = smul.addr %s1228, 8
          %s1230 = scalar_lea.hbm %s13, %s1229
          %s1231 = sshll.u32 %s1188, 4
          %s1232 = int_to_ptr.vmem [resolvable:$true] %s1231
          %s1233 = sshll.u32 %s1230, 4
          %s1234 = int_to_ptr.hbm [resolvable:$true] %s1233
          %1239 = dma.vmem_to_hbm [thread:$0]  %s1232, 256, %s1234, %s1185, 128, 128, 8
        $region108: #{tpu_custom_call.1} parent=63 // pred_fallthru
          _
      $region64: #{tpu_custom_call.1} parent=5 // pred_fallthru
        _
      %p1240 = scmp.le.s32.totalorder 2, %s35
      // Predicated region
      $region109: #{tpu_custom_call.1} parent=5 // pred_check
        %p1241 = pneg %p1240
      $region110: #{tpu_custom_call.1} parent=5 // pred_check_branch
        %1243 = sbr.rel (%p1241) target = $region112
      $region111: #{tpu_custom_call.1} parent=5 // pred_region
        %s1244 = ssub.s32 %s35, 2
        // Predicated region
        $region113: #{tpu_custom_call.1} parent=111 // pred_check
          %p1245 = pneg %p310
        $region114: #{tpu_custom_call.1} parent=111 // pred_check_branch
          %1247 = sbr.rel (%p1245) target = $region116
        $region115: #{tpu_custom_call.1} parent=111 // pred_region
          %s1248 = sand.u32 %s295, 1
          %s1249 = scalar_lea.sflag [#allocation4], %s1248
          %s1250 = sand.u32 %s295, 1
          %s1251 = smul.addr %s1250, 16
          %s1252 = scalar_lea.vmem [#allocation16], %s1251
          %1254 = dma.done %s1249, 256
        $region116: #{tpu_custom_call.1} parent=111 // pred_fallthru
          _
        // Predicated region
        $region117: #{tpu_custom_call.1} parent=111 // pred_check
          %p1255 = pneg %p336
        $region118: #{tpu_custom_call.1} parent=111 // pred_check_branch
          %1257 = sbr.rel (%p1255) target = $region120
        $region119: #{tpu_custom_call.1} parent=111 // pred_region
          %s1258 = sand.u32 %s41, 1
          %s1259 = scalar_lea.sflag [#allocation18], %s1258
          %s1260 = sand.u32 %s321, 1
          %s1261 = smul.addr %s1260, 16
          %s1262 = scalar_lea.vmem [#allocation17], %s1261
          %1264 = dma.done %s1259, 256
        $region120: #{tpu_custom_call.1} parent=111 // pred_fallthru
          _
        // Predicated region
        $region121: #{tpu_custom_call.1} parent=111 // pred_check
          %p1265 = pneg %p362
        $region122: #{tpu_custom_call.1} parent=111 // pred_check_branch
          %1267 = sbr.rel (%p1265) target = $region124
        $region123: #{tpu_custom_call.1} parent=111 // pred_region
          %s1268 = sand.u32 %s41, 1
          %s1269 = scalar_lea.sflag [#allocation18], %s1268
          %s1270 = sand.u32 %s347, 1
          %s1271 = smul.addr %s1270, 16
          %s1272 = scalar_lea.vmem [#allocation19], %s1271
          %1274 = dma.done %s1269, 256
        $region124: #{tpu_custom_call.1} parent=111 // pred_fallthru
          _
      $region112: #{tpu_custom_call.1} parent=5 // pred_fallthru
        _
    $region6: #{tpu_custom_call.1} parent=1 // loop_footer
      %s39 = sadd.s32 1, %s35
    $region7: #{tpu_custom_call.1} parent=1 // loop_footer_branch
      %34 = sbr.rel target = $region3
    $region8: #{tpu_custom_call.1} parent=1 // loop_exit
      _
    %1275 = vsyncpa [#allocation3], 1
    %s1276 = scalar_lea.sflag [#allocation3], 1
    %1277 = vsyncpa %s1276, 1
    %1278 = vsyncpa [#allocation6], 1
    %s1279 = scalar_lea.sflag [#allocation6], 1
    %1280 = vsyncpa %s1279, 1
    %1281 = vsyncpa [#allocation9], 1
    %1282 = vsyncpa [#allocation12], 1
    %1283 = vsyncpa [#allocation15], 1
    %1284 = vsyncpa [#allocation4], 1
    %s1285 = scalar_lea.sflag [#allocation4], 1
    %1286 = vsyncpa %s1285, 1
    %1287 = vsyncpa [#allocation18], 1
    %s1288 = scalar_lea.sflag [#allocation18], 1
    %1289 = vsyncpa %s1288, 1

</llo_original>
